<compile_context>
chip_gen: v5e
topology: v5e:2x2
jax: 0.10.0
libtpu: 0.0.40
codegen_flags: <defaults>
</compile_context>

<pallas_src>
import jax
import jax.numpy as jnp
from jax.experimental import pallas as pl
from jax.experimental.pallas import tpu as pltpu

IN_DIM = 429
IN_PAD = 512       # 429 -> 512: lane-aligned K for the first matmul
HID = 512
OUT_DIM = 39
OUT_PAD = 128      # 39 -> 128: lane-dense output stores
BN_EPS = 1e-5
NORM_EPS = 1e-12


def _round_up(x, m):
    return (x + m - 1) // m * m


# ---------------------------------------------------------------------------
# Kernel: one batch tile of TB rows.
# ---------------------------------------------------------------------------
def _classifier_kernel(x_ref,
                       w1_ref, b1_ref,
                       w2_ref, b2_ref,
                       w3_ref, b3_ref,
                       wout_ref,
                       o_ref):
    def layer(h, w_ref, b_ref):
        z = jnp.dot(h.astype(w_ref.dtype), w_ref[...],
                    preferred_element_type=jnp.float32)
        z = z + b_ref[...]                       # BN already folded into w/b
        return jax.nn.sigmoid(z)                 # dropout = identity in eval

    h = x_ref[...].astype(jnp.float32)
    h = layer(h, w1_ref, b1_ref)
    h = layer(h, w2_ref, b2_ref)
    h = layer(h, w3_ref, b3_ref)

    # F.normalize(h, p=2, dim=1)
    norm = jnp.sqrt(jnp.sum(h * h, axis=-1, keepdims=True))
    hn = h / jnp.maximum(norm, NORM_EPS)

    # wout_ref is already row-normalized, transposed to (HID, OUT_PAD), zero-padded.
    o_ref[...] = jnp.dot(hn.astype(wout_ref.dtype), wout_ref[...],
                         preferred_element_type=jnp.float32)


# ---------------------------------------------------------------------------
# Wrapper-side constant prep: fold BN, normalize/transpose out.weight, pad.
# ---------------------------------------------------------------------------
def _prepare_inference_params(params, matmul_dtype):
    def fold(w, b, g, be, m, v):
        scale = g * jax.lax.rsqrt(v + BN_EPS)            # (1, HID)
        w_f = (w * scale).astype(matmul_dtype)           # (in, out) * (1, out)
        b_f = ((b - m) * scale + be).astype(jnp.float32) # (1, out)
        return w_f, b_f

    w1, b1 = fold(params["w1"], params["b1"], params["g1"], params["be1"],
                  params["m1"], params["v1"])
    w2, b2 = fold(params["w2"], params["b2"], params["g2"], params["be2"],
                  params["m2"], params["v2"])
    w3, b3 = fold(params["w3"], params["b3"], params["g3"], params["be3"],
                  params["m3"], params["v3"])

    # Zero-pad w1 rows 429 -> 512 (matches zero-padded x columns).
    w1 = jnp.pad(w1, ((0, IN_PAD - IN_DIM), (0, 0)))

    # F.normalize(out.weight, p=2, dim=1), transpose to (HID, OUT), pad lanes.
    wout = params["wout"]
    wn = wout / jnp.maximum(
        jnp.sqrt(jnp.sum(wout * wout, axis=-1, keepdims=True)), NORM_EPS)
    wout_t = jnp.pad(wn.T, ((0, 0), (0, OUT_PAD - OUT_DIM))).astype(matmul_dtype)

    return w1, b1, w2, b2, w3, b3, wout_t


# ---------------------------------------------------------------------------
# Public forward.
# ---------------------------------------------------------------------------
def classifier_forward(x, params, *, block_rows=512, matmul_dtype=jnp.float32):
    """x: (B, 429) f32.  params: dict from init_params()."""
    b = x.shape[0]
    tb = min(block_rows, _round_up(b, 8))   # batch tile (multiple of 8 sublanes)
    b_pad = _round_up(b, tb)

    x_p = jnp.pad(x.astype(jnp.float32),
                  ((0, b_pad - b), (0, IN_PAD - IN_DIM)))

    w1, b1, w2, b2, w3, b3, wout_t = _prepare_inference_params(params, matmul_dtype)

    def batch_spec(shape):
        return pl.BlockSpec(shape, lambda i: (i, 0))

    def resident_spec(arr):
        # Constant block index -> DMA'd once, stays resident across grid steps.
        return pl.BlockSpec(arr.shape, lambda i: (0, 0))

    out = pl.pallas_call(
        _classifier_kernel,
        out_shape=jax.ShapeDtypeStruct((b_pad, OUT_PAD), jnp.float32),
        grid=(b_pad // tb,),
        in_specs=[
            batch_spec((tb, IN_PAD)),
            resident_spec(w1), resident_spec(b1),
            resident_spec(w2), resident_spec(b2),
            resident_spec(w3), resident_spec(b3),
            resident_spec(wout_t),
        ],
        out_specs=batch_spec((tb, OUT_PAD)),
        compiler_params=pltpu.CompilerParams(
            dimension_semantics=("parallel",),
            vmem_limit_bytes=48 * 1024 * 1024,
        ),
    )(x_p, w1, b1, w2, b2, w3, b3, wout_t)

    return out[:b, :OUT_DIM]


# ---------------------------------------------------------------------------
# Parameter init mirroring PyTorch defaults.
# ---------------------------------------------------------------------------
def init_params(key):
    keys = jax.random.split(key, 8)

    def linear(kw, kb, fan_in, fan_out):
        bound = 1.0 / jnp.sqrt(jnp.float32(fan_in))
        # stored pre-transposed: (in, out) so forward is x @ W
        w = jax.random.uniform(kw, (fan_in, fan_out), jnp.float32, -bound, bound)
        b = jax.random.uniform(kb, (1, fan_out), jnp.float32, -bound, bound)
        return w, b

    w1, b1 = linear(keys[0], keys[1], IN_DIM, HID)
    w2, b2 = linear(keys[2], keys[3], HID, HID)
    w3, b3 = linear(keys[4], keys[5], HID, HID)
    bound = 1.0 / jnp.sqrt(jnp.float32(HID))
    # out layer kept in PyTorch layout (39, 512); normalized/transposed in wrapper
    wout = jax.random.uniform(keys[6], (OUT_DIM, HID), jnp.float32, -bound, bound)

    def bn():
        return (jnp.ones((1, HID), jnp.float32),    # gamma
                jnp.zeros((1, HID), jnp.float32),   # beta
                jnp.zeros((1, HID), jnp.float32),   # running_mean
                jnp.ones((1, HID), jnp.float32))    # running_var

    g1, be1, m1, v1 = bn()
    g2, be2, m2, v2 = bn()
    g3, be3, m3, v3 = bn()

    return dict(w1=w1, b1=b1, g1=g1, be1=be1, m1=m1, v1=v1,
                w2=w2, b2=b2, g2=g2, be2=be2, m2=m2, v2=v2,
                w3=w3, b3=b3, g3=g3, be3=be3, m3=m3, v3=v3,
                wout=wout)


# ---------------------------------------------------------------------------
# Pure-JAX reference (un-folded, un-padded) for correctness checks.
# ---------------------------------------------------------------------------
def _reference_forward(x, p):
    def blk(h, w, b, g, be, m, v):
        z = h @ w + b
        z = (z - m) * (g / jnp.sqrt(v + BN_EPS)) + be
        return jax.nn.sigmoid(z)

    h = blk(x, p["w1"], p["b1"], p["g1"], p["be1"], p["m1"], p["v1"])
    h = blk(h, p["w2"], p["b2"], p["g2"], p["be2"], p["m2"], p["v2"])
    h = blk(h, p["w3"], p["b3"], p["g3"], p["be3"], p["m3"], p["v3"])
    hn = h / jnp.maximum(jnp.linalg.norm(h, axis=-1, keepdims=True), NORM_EPS)
    w = p["wout"]
    wn = w / jnp.maximum(jnp.linalg.norm(w, axis=-1, keepdims=True), NORM_EPS)
    return hn @ wn.T


if __name__ == "__main__":
    key = jax.random.PRNGKey(0)
    kx, kp = jax.random.split(key)
    batch = 8
    x = jax.random.normal(kx, (batch, IN_DIM), jnp.float32)
    params = init_params(kp)

    ref = _reference_forward(x, params)

    # f32 matmul-operand path (safe default; v5e elementwise stays f32 anyway).
    out_f32 = jax.block_until_ready(classifier_forward(x, params))
    assert out_f32.shape == (batch, OUT_DIM)
    assert jnp.allclose(out_f32, ref, atol=1e-4, rtol=1e-4), \
        float(jnp.max(jnp.abs(out_f32 - ref)))

    # bf16 matmul-operand path (f32 accumulate + f32 elementwise) for v6e/v7x.
    out_bf16 = jax.block_until_ready(
        classifier_forward(x, params, matmul_dtype=jnp.bfloat16))
    assert out_bf16.shape == (batch, OUT_DIM)
    assert jnp.allclose(out_bf16, ref, atol=5e-2, rtol=5e-2), \
        float(jnp.max(jnp.abs(out_bf16 - ref)))

    print("KERNEL_OK")
</pallas_src>

<mosaic_0001>
module attributes {stable_mosaic.version = 11 : i64} {
  func.func @_classifier_kernel(%arg0: i32, %arg1: memref<8x512xf32, #tpu.memory_space<vmem>>, %arg2: memref<512x512xf32, #tpu.memory_space<vmem>>, %arg3: memref<1x512xf32, #tpu.memory_space<vmem>>, %arg4: memref<512x512xf32, #tpu.memory_space<vmem>>, %arg5: memref<1x512xf32, #tpu.memory_space<vmem>>, %arg6: memref<512x512xf32, #tpu.memory_space<vmem>>, %arg7: memref<1x512xf32, #tpu.memory_space<vmem>>, %arg8: memref<512x128xf32, #tpu.memory_space<vmem>>, %arg9: memref<8x128xf32, #tpu.memory_space<vmem>>) attributes {dimension_semantics = [#tpu.dimension_semantics<parallel>], iteration_bounds = array<i64: 1>, scalar_prefetch = 0 : i64, scratch_operands = 0 : i64, tpu.core_type = #tpu.core_type<tc>, window_params = [{transform_indices = @transform_0, window_bounds = array<i64: 8, 512>}, {pipeline_mode = #tpu.pipeline_mode<synchronous>, transform_indices = @transform_1, window_bounds = array<i64: 512, 512>}, {pipeline_mode = #tpu.pipeline_mode<synchronous>, transform_indices = @transform_2, window_bounds = array<i64: 1, 512>}, {pipeline_mode = #tpu.pipeline_mode<synchronous>, transform_indices = @transform_3, window_bounds = array<i64: 512, 512>}, {pipeline_mode = #tpu.pipeline_mode<synchronous>, transform_indices = @transform_4, window_bounds = array<i64: 1, 512>}, {pipeline_mode = #tpu.pipeline_mode<synchronous>, transform_indices = @transform_5, window_bounds = array<i64: 512, 512>}, {pipeline_mode = #tpu.pipeline_mode<synchronous>, transform_indices = @transform_6, window_bounds = array<i64: 1, 512>}, {pipeline_mode = #tpu.pipeline_mode<synchronous>, transform_indices = @transform_7, window_bounds = array<i64: 512, 128>}, {transform_indices = @transform_8, window_bounds = array<i64: 8, 128>}]} {
    %c0 = arith.constant 0 : index
    %c0_0 = arith.constant 0 : index
    %0 = vector.load %arg1[%c0, %c0_0] : memref<8x512xf32, #tpu.memory_space<vmem>>, vector<8x512xf32>
    %c0_1 = arith.constant 0 : index
    %c0_2 = arith.constant 0 : index
    %1 = vector.load %arg2[%c0_1, %c0_2] : memref<512x512xf32, #tpu.memory_space<vmem>>, vector<512x512xf32>
    %cst = arith.constant dense<0.000000e+00> : vector<8x512xf32>
    %2 = tpu.matmul %0, %1, %cst {dimension_numbers = #tpu.dot_dimension_numbers<[1], [0], [0], [1], [0, 0, 1, 1], [], []>} : vector<8x512xf32>, vector<512x512xf32>, vector<8x512xf32> -> vector<8x512xf32>
    %c0_3 = arith.constant 0 : index
    %c0_4 = arith.constant 0 : index
    %3 = vector.load %arg3[%c0_3, %c0_4] : memref<1x512xf32, #tpu.memory_space<vmem>>, vector<1x512xf32>
    %4 = vector.broadcast %3 : vector<1x512xf32> to vector<8x512xf32>
    %5 = arith.addf %2, %4 : vector<8x512xf32>
    %6 = arith.negf %5 : vector<8x512xf32>
    %7 = math.exp %6 : vector<8x512xf32>
    %cst_5 = arith.constant 1.000000e+00 : f32
    %8 = vector.broadcast %cst_5 : f32 to vector<8x512xf32>
    %9 = arith.addf %8, %7 : vector<8x512xf32>
    %10 = arith.divf %8, %9 : vector<8x512xf32>
    %c0_6 = arith.constant 0 : index
    %c0_7 = arith.constant 0 : index
    %11 = vector.load %arg4[%c0_6, %c0_7] : memref<512x512xf32, #tpu.memory_space<vmem>>, vector<512x512xf32>
    %cst_8 = arith.constant dense<0.000000e+00> : vector<8x512xf32>
    %12 = tpu.matmul %10, %11, %cst_8 {dimension_numbers = #tpu.dot_dimension_numbers<[1], [0], [0], [1], [0, 0, 1, 1], [], []>} : vector<8x512xf32>, vector<512x512xf32>, vector<8x512xf32> -> vector<8x512xf32>
    %c0_9 = arith.constant 0 : index
    %c0_10 = arith.constant 0 : index
    %13 = vector.load %arg5[%c0_9, %c0_10] : memref<1x512xf32, #tpu.memory_space<vmem>>, vector<1x512xf32>
    %14 = vector.broadcast %13 : vector<1x512xf32> to vector<8x512xf32>
    %15 = arith.addf %12, %14 : vector<8x512xf32>
    %16 = arith.negf %15 : vector<8x512xf32>
    %17 = math.exp %16 : vector<8x512xf32>
    %cst_11 = arith.constant 1.000000e+00 : f32
    %18 = vector.broadcast %cst_11 : f32 to vector<8x512xf32>
    %19 = arith.addf %18, %17 : vector<8x512xf32>
    %20 = arith.divf %18, %19 : vector<8x512xf32>
    %c0_12 = arith.constant 0 : index
    %c0_13 = arith.constant 0 : index
    %21 = vector.load %arg6[%c0_12, %c0_13] : memref<512x512xf32, #tpu.memory_space<vmem>>, vector<512x512xf32>
    %cst_14 = arith.constant dense<0.000000e+00> : vector<8x512xf32>
    %22 = tpu.matmul %20, %21, %cst_14 {dimension_numbers = #tpu.dot_dimension_numbers<[1], [0], [0], [1], [0, 0, 1, 1], [], []>} : vector<8x512xf32>, vector<512x512xf32>, vector<8x512xf32> -> vector<8x512xf32>
    %c0_15 = arith.constant 0 : index
    %c0_16 = arith.constant 0 : index
    %23 = vector.load %arg7[%c0_15, %c0_16] : memref<1x512xf32, #tpu.memory_space<vmem>>, vector<1x512xf32>
    %24 = vector.broadcast %23 : vector<1x512xf32> to vector<8x512xf32>
    %25 = arith.addf %22, %24 : vector<8x512xf32>
    %26 = arith.negf %25 : vector<8x512xf32>
    %27 = math.exp %26 : vector<8x512xf32>
    %cst_17 = arith.constant 1.000000e+00 : f32
    %28 = vector.broadcast %cst_17 : f32 to vector<8x512xf32>
    %29 = arith.addf %28, %27 : vector<8x512xf32>
    %30 = arith.divf %28, %29 : vector<8x512xf32>
    %31 = arith.mulf %30, %30 : vector<8x512xf32>
    %cst_18 = arith.constant dense<0.000000e+00> : vector<8xf32>
    %32 = vector.multi_reduction <add>, %31, %cst_18 [1] : vector<8x512xf32> to vector<8xf32>
    %33 = vector.shape_cast %32 : vector<8xf32> to vector<8x1xf32>
    %34 = math.sqrt %33 : vector<8x1xf32>
    %cst_19 = arith.constant 9.99999996E-13 : f32
    %35 = vector.broadcast %cst_19 : f32 to vector<8x1xf32>
    %36 = arith.maximumf %34, %35 : vector<8x1xf32>
    %37 = vector.broadcast %36 : vector<8x1xf32> to vector<8x512xf32>
    %38 = arith.divf %30, %37 : vector<8x512xf32>
    %c0_20 = arith.constant 0 : index
    %c0_21 = arith.constant 0 : index
    %39 = vector.load %arg8[%c0_20, %c0_21] : memref<512x128xf32, #tpu.memory_space<vmem>>, vector<512x128xf32>
    %cst_22 = arith.constant dense<0.000000e+00> : vector<8x128xf32>
    %40 = tpu.matmul %38, %39, %cst_22 {dimension_numbers = #tpu.dot_dimension_numbers<[1], [0], [0], [1], [0, 0, 1, 1], [], []>} : vector<8x512xf32>, vector<512x128xf32>, vector<8x128xf32> -> vector<8x128xf32>
    %c0_23 = arith.constant 0 : index
    %c0_24 = arith.constant 0 : index
    %41 = vector.load %arg9[%c0_23, %c0_24] : memref<8x128xf32, #tpu.memory_space<vmem>>, vector<8x128xf32>
    tpu.vector_store %arg9[%c0_23, %c0_24], %40 {strides = array<i32>} : memref<8x128xf32, #tpu.memory_space<vmem>>, vector<8x128xf32>,
    return
  }
  func.func @transform_0(%arg0: i32) -> (i32, i32) {
    %c0_i32 = arith.constant 0 : i32
    %c0_i32_0 = arith.constant 0 : i32
    return %arg0, %c0_i32 : i32, i32
  }
  func.func @transform_1(%arg0: i32) -> (i32, i32) {
    %c0_i32 = arith.constant 0 : i32
    %c0_i32_0 = arith.constant 0 : i32
    %c0_i32_1 = arith.constant 0 : i32
    return %c0_i32, %c0_i32_0 : i32, i32
  }
  func.func @transform_2(%arg0: i32) -> (i32, i32) {
    %c0_i32 = arith.constant 0 : i32
    %c0_i32_0 = arith.constant 0 : i32
    %c0_i32_1 = arith.constant 0 : i32
    return %c0_i32, %c0_i32_0 : i32, i32
  }
  func.func @transform_3(%arg0: i32) -> (i32, i32) {
    %c0_i32 = arith.constant 0 : i32
    %c0_i32_0 = arith.constant 0 : i32
    %c0_i32_1 = arith.constant 0 : i32
    return %c0_i32, %c0_i32_0 : i32, i32
  }
  func.func @transform_4(%arg0: i32) -> (i32, i32) {
    %c0_i32 = arith.constant 0 : i32
    %c0_i32_0 = arith.constant 0 : i32
    %c0_i32_1 = arith.constant 0 : i32
    return %c0_i32, %c0_i32_0 : i32, i32
  }
  func.func @transform_5(%arg0: i32) -> (i32, i32) {
    %c0_i32 = arith.constant 0 : i32
    %c0_i32_0 = arith.constant 0 : i32
    %c0_i32_1 = arith.constant 0 : i32
    return %c0_i32, %c0_i32_0 : i32, i32
  }
  func.func @transform_6(%arg0: i32) -> (i32, i32) {
    %c0_i32 = arith.constant 0 : i32
    %c0_i32_0 = arith.constant 0 : i32
    %c0_i32_1 = arith.constant 0 : i32
    return %c0_i32, %c0_i32_0 : i32, i32
  }
  func.func @transform_7(%arg0: i32) -> (i32, i32) {
    %c0_i32 = arith.constant 0 : i32
    %c0_i32_0 = arith.constant 0 : i32
    %c0_i32_1 = arith.constant 0 : i32
    return %c0_i32, %c0_i32_0 : i32, i32
  }
  func.func @transform_8(%arg0: i32) -> (i32, i32) {
    %c0_i32 = arith.constant 0 : i32
    %c0_i32_0 = arith.constant 0 : i32
    return %arg0, %c0_i32 : i32, i32
  }
}

</mosaic_0001>

<llo_original>
// kernel: tpu_custom_call.1
$region0: #{tpu_custom_call.1}
  #allocation0 [shape = 'u32[]', space=smem, size = 0x4, offset = 0x4, fixed_abs, tag = 'smem constant byte address 0x4 - core index']
  #allocation1 [shape = 'u32[72,128]{1,0:T(1,128)}', space=vmem, size = 0x9000, scoped, tag = 'internal scratch']
  %s0 = inlined_call_operand.hbm [shape: f32[8,512], index: 0, kind: input, shape index: {}]
  %s1 = inlined_call_operand.hbm [shape: f32[512,512], index: 1, kind: input, shape index: {}]
  %s2 = inlined_call_operand.hbm [shape: f32[1,512], index: 2, kind: input, shape index: {}]
  %s3 = inlined_call_operand.hbm [shape: f32[512,512], index: 3, kind: input, shape index: {}]
  %s4 = inlined_call_operand.hbm [shape: f32[1,512], index: 4, kind: input, shape index: {}]
  %s5 = inlined_call_operand.hbm [shape: f32[512,512], index: 5, kind: input, shape index: {}]
  %s6 = inlined_call_operand.vmem [shape: f32[1,512], index: 6, kind: input, shape index: {}]
  %s7 = inlined_call_operand.hbm [shape: f32[512,128], index: 7, kind: input, shape index: {}]
  %s8 = inlined_call_operand.hbm [shape: f32[8,128], index: 8, kind: output, shape index: {}]
  %s9 = sld [smem:[#allocation0]]
  $region70: #{tpu_custom_call.1} parent=0
    _
  %s11 = ssub.s32 1, %s9
  %s12 = scalar_select 0, %s11, %s9
  $region1: #{tpu_custom_call.1} parent=0
    #allocation2 [shape = 'u8[16384]{0}', space=vmem, size = 0x4000, scoped, tag = 'input window, operand 0, single buffered']
    #allocation3 [shape = 's32[1]{0}', space=sflag, size = 0x4, scoped, tag = 'scoped memory for tpu_custom_call.1']
    #allocation4 [shape = 's32[1]{0}', space=sflag, size = 0x4, scoped, tag = 'scoped memory for tpu_custom_call.1']
    #allocation5 [shape = 'u8[1048576]{0}', space=vmem, size = 0x100000, scoped, tag = 'input window, operand 1, single buffered']
    #allocation6 [shape = 's32[1]{0}', space=sflag, size = 0x4, scoped, tag = 'scoped memory for tpu_custom_call.1']
    #allocation7 [shape = 'u8[2048]{0}', space=vmem, size = 0x800, scoped, tag = 'input window, operand 2, single buffered']
    #allocation8 [shape = 'u8[1048576]{0}', space=vmem, size = 0x100000, scoped, tag = 'input window, operand 3, single buffered']
    #allocation9 [shape = 's32[1]{0}', space=sflag, size = 0x4, scoped, tag = 'scoped memory for tpu_custom_call.1']
    #allocation10 [shape = 'u8[2048]{0}', space=vmem, size = 0x800, scoped, tag = 'input window, operand 4, single buffered']
    #allocation11 [shape = 'u8[1048576]{0}', space=vmem, size = 0x100000, scoped, tag = 'input window, operand 5, single buffered']
    #allocation12 [shape = 's32[1]{0}', space=sflag, size = 0x4, scoped, tag = 'scoped memory for tpu_custom_call.1']
    #allocation13 [shape = 'u8[262144]{0}', space=vmem, size = 0x40000, scoped, tag = 'input window, operand 7, single buffered']
    #allocation14 [shape = 'u8[4096]{0}', space=vmem, size = 0x1000, scoped, tag = 'output window, operand 0, single buffered']
    %13 = vsyncpa [#allocation3], 0
    %14 = vsyncpa [#allocation6], 0
    %15 = vsyncpa [#allocation9], 0
    %16 = vsyncpa [#allocation12], 0
    %17 = vsyncpa [#allocation4], 0
    // Predicated region
    $region2: #{tpu_custom_call.1} parent=1 // pred_check
      _
    $region3: #{tpu_custom_call.1} parent=1 // pred_check_branch
      %19 = sbr.rel (0) target = $region5
    $region4: #{tpu_custom_call.1} parent=1 // pred_region
      %21 = vsyncadd [#allocation3], 0
      %s23 = sshll.u32 %s0, 4
      %s24 = int_to_ptr.hbm [resolvable:$true] %s23
      %s25 = sshll.u32 [#allocation2], 4
      %s26 = int_to_ptr.vmem [resolvable:$true] %s25
      %28 = dma.hbm_to_vmem [thread:$0]  %s24, 512, %s26, [#allocation3]
    $region5: #{tpu_custom_call.1} parent=1 // pred_fallthru
      _
    // Predicated region
    $region6: #{tpu_custom_call.1} parent=1 // pred_check
      _
    $region7: #{tpu_custom_call.1} parent=1 // pred_check_branch
      %30 = sbr.rel (0) target = $region9
    $region8: #{tpu_custom_call.1} parent=1 // pred_region
      %32 = vsyncadd [#allocation6], 0
      %s33 = sshll.u32 %s1, 4
      %s34 = int_to_ptr.hbm [resolvable:$true] %s33
      %s35 = sshll.u32 [#allocation5], 4
      %s36 = int_to_ptr.vmem [resolvable:$true] %s35
      %41 = dma.hbm_to_vmem [thread:$0]  %s34, 32768, %s36, [#allocation6], 512, 512, 32
    $region9: #{tpu_custom_call.1} parent=1 // pred_fallthru
      _
    // Predicated region
    $region10: #{tpu_custom_call.1} parent=1 // pred_check
      _
    $region11: #{tpu_custom_call.1} parent=1 // pred_check_branch
      %43 = sbr.rel (0) target = $region13
    $region12: #{tpu_custom_call.1} parent=1 // pred_region
      %45 = vsyncadd [#allocation6], 0
      %s47 = sshll.u32 %s2, 4
      %s48 = int_to_ptr.hbm [resolvable:$true] %s47
      %s49 = sshll.u32 [#allocation7], 4
      %s50 = int_to_ptr.vmem [resolvable:$true] %s49
      %52 = dma.hbm_to_vmem [thread:$0]  %s48, 64, %s50, [#allocation6]
    $region13: #{tpu_custom_call.1} parent=1 // pred_fallthru
      _
    // Predicated region
    $region14: #{tpu_custom_call.1} parent=1 // pred_check
      _
    $region15: #{tpu_custom_call.1} parent=1 // pred_check_branch
      %54 = sbr.rel (0) target = $region17
    $region16: #{tpu_custom_call.1} parent=1 // pred_region
      %56 = vsyncadd [#allocation9], 0
      %s57 = sshll.u32 %s3, 4
      %s58 = int_to_ptr.hbm [resolvable:$true] %s57
      %s59 = sshll.u32 [#allocation8], 4
      %s60 = int_to_ptr.vmem [resolvable:$true] %s59
      %65 = dma.hbm_to_vmem [thread:$0]  %s58, 32768, %s60, [#allocation9], 512, 512, 32
    $region17: #{tpu_custom_call.1} parent=1 // pred_fallthru
      _
    // Predicated region
    $region18: #{tpu_custom_call.1} parent=1 // pred_check
      _
    $region19: #{tpu_custom_call.1} parent=1 // pred_check_branch
      %67 = sbr.rel (0) target = $region21
    $region20: #{tpu_custom_call.1} parent=1 // pred_region
      %69 = vsyncadd [#allocation9], 0
      %s71 = sshll.u32 %s4, 4
      %s72 = int_to_ptr.hbm [resolvable:$true] %s71
      %s73 = sshll.u32 [#allocation10], 4
      %s74 = int_to_ptr.vmem [resolvable:$true] %s73
      %76 = dma.hbm_to_vmem [thread:$0]  %s72, 64, %s74, [#allocation9]
    $region21: #{tpu_custom_call.1} parent=1 // pred_fallthru
      _
    // Predicated region
    $region22: #{tpu_custom_call.1} parent=1 // pred_check
      _
    $region23: #{tpu_custom_call.1} parent=1 // pred_check_branch
      %78 = sbr.rel (0) target = $region25
    $region24: #{tpu_custom_call.1} parent=1 // pred_region
      %80 = vsyncadd [#allocation12], 0
      %s81 = sshll.u32 %s5, 4
      %s82 = int_to_ptr.hbm [resolvable:$true] %s81
      %s83 = sshll.u32 [#allocation11], 4
      %s84 = int_to_ptr.vmem [resolvable:$true] %s83
      %89 = dma.hbm_to_vmem [thread:$0]  %s82, 32768, %s84, [#allocation12], 512, 512, 32
    $region25: #{tpu_custom_call.1} parent=1 // pred_fallthru
      _
    // Predicated region
    $region26: #{tpu_custom_call.1} parent=1 // pred_check
      _
    $region27: #{tpu_custom_call.1} parent=1 // pred_check_branch
      %91 = sbr.rel (0) target = $region29
    $region28: #{tpu_custom_call.1} parent=1 // pred_region
      _
    $region29: #{tpu_custom_call.1} parent=1 // pred_fallthru
      _
    // Predicated region
    $region30: #{tpu_custom_call.1} parent=1 // pred_check
      _
    $region31: #{tpu_custom_call.1} parent=1 // pred_check_branch
      %93 = sbr.rel (0) target = $region33
    $region32: #{tpu_custom_call.1} parent=1 // pred_region
      %95 = vsyncadd [#allocation12], 0
      %s96 = sshll.u32 %s7, 4
      %s97 = int_to_ptr.hbm [resolvable:$true] %s96
      %s98 = sshll.u32 [#allocation13], 4
      %s99 = int_to_ptr.vmem [resolvable:$true] %s98
      %104 = dma.hbm_to_vmem [thread:$0]  %s97, 8192, %s99, [#allocation12], 128, 128, 8
    $region33: #{tpu_custom_call.1} parent=1 // pred_fallthru
      _
    // Predicated region
    $region34: #{tpu_custom_call.1} parent=1 // pred_check
      _
    $region35: #{tpu_custom_call.1} parent=1 // pred_check_branch
      %106 = sbr.rel (0) target = $region37
    $region36: #{tpu_custom_call.1} parent=1 // pred_region
      %108 = dma.done [#allocation3], 512
    $region37: #{tpu_custom_call.1} parent=1 // pred_fallthru
      _
    // Predicated region
    $region38: #{tpu_custom_call.1} parent=1 // pred_check
      _
    $region39: #{tpu_custom_call.1} parent=1 // pred_check_branch
      %110 = sbr.rel (0) target = $region41
    $region40: #{tpu_custom_call.1} parent=1 // pred_region
      %112 = dma.done [#allocation6], 32768
    $region41: #{tpu_custom_call.1} parent=1 // pred_fallthru
      _
    // Predicated region
    $region42: #{tpu_custom_call.1} parent=1 // pred_check
      _
    $region43: #{tpu_custom_call.1} parent=1 // pred_check_branch
      %114 = sbr.rel (0) target = $region45
    $region44: #{tpu_custom_call.1} parent=1 // pred_region
      %116 = dma.done [#allocation6], 64
    $region45: #{tpu_custom_call.1} parent=1 // pred_fallthru
      _
    // Predicated region
    $region46: #{tpu_custom_call.1} parent=1 // pred_check
      _
    $region47: #{tpu_custom_call.1} parent=1 // pred_check_branch
      %118 = sbr.rel (0) target = $region49
    $region48: #{tpu_custom_call.1} parent=1 // pred_region
      %120 = dma.done [#allocation9], 32768
    $region49: #{tpu_custom_call.1} parent=1 // pred_fallthru
      _
    // Predicated region
    $region50: #{tpu_custom_call.1} parent=1 // pred_check
      _
    $region51: #{tpu_custom_call.1} parent=1 // pred_check_branch
      %122 = sbr.rel (0) target = $region53
    $region52: #{tpu_custom_call.1} parent=1 // pred_region
      %124 = dma.done [#allocation9], 64
    $region53: #{tpu_custom_call.1} parent=1 // pred_fallthru
      _
    // Predicated region
    $region54: #{tpu_custom_call.1} parent=1 // pred_check
      _
    $region55: #{tpu_custom_call.1} parent=1 // pred_check_branch
      %126 = sbr.rel (0) target = $region57
    $region56: #{tpu_custom_call.1} parent=1 // pred_region
      %128 = dma.done [#allocation12], 32768
    $region57: #{tpu_custom_call.1} parent=1 // pred_fallthru
      _
    // Predicated region
    $region58: #{tpu_custom_call.1} parent=1 // pred_check
      _
    $region59: #{tpu_custom_call.1} parent=1 // pred_check_branch
      %130 = sbr.rel (0) target = $region61
    $region60: #{tpu_custom_call.1} parent=1 // pred_region
      %132 = dma.done [#allocation12], 8192
    $region61: #{tpu_custom_call.1} parent=1 // pred_fallthru
      _
    %v133 = vld [vmem:[#allocation2] sm:$0xff]
    %v134 = vld [vmem:[#allocation2 + $0x8] sm:$0xff]
    %v135 = vld [vmem:[#allocation2 + $0x10] sm:$0xff]
    %v136 = vld [vmem:[#allocation2 + $0x18] sm:$0xff]
    %v137 = vld [vmem:[#allocation5] sm:$0xff]
    %v138 = vld [vmem:[#allocation5 + $0x8] sm:$0xff]
    %v139 = vld [vmem:[#allocation5 + $0x10] sm:$0xff]
    %v140 = vld [vmem:[#allocation5 + $0x18] sm:$0xff]
    %v141 = vld [vmem:[#allocation5 + $0x20] sm:$0xff]
    %v142 = vld [vmem:[#allocation5 + $0x28] sm:$0xff]
    %v143 = vld [vmem:[#allocation5 + $0x30] sm:$0xff]
    %v144 = vld [vmem:[#allocation5 + $0x38] sm:$0xff]
    %v145 = vld [vmem:[#allocation5 + $0x40] sm:$0xff]
    %v146 = vld [vmem:[#allocation5 + $0x48] sm:$0xff]
    %v147 = vld [vmem:[#allocation5 + $0x50] sm:$0xff]
    %v148 = vld [vmem:[#allocation5 + $0x58] sm:$0xff]
    %v149 = vld [vmem:[#allocation5 + $0x60] sm:$0xff]
    %v150 = vld [vmem:[#allocation5 + $0x68] sm:$0xff]
    %v151 = vld [vmem:[#allocation5 + $0x70] sm:$0xff]
    %v152 = vld [vmem:[#allocation5 + $0x78] sm:$0xff]
    %v153 = vld [vmem:[#allocation5 + $0x80] sm:$0xff]
    %v154 = vld [vmem:[#allocation5 + $0x88] sm:$0xff]
    %v155 = vld [vmem:[#allocation5 + $0x90] sm:$0xff]
    %v156 = vld [vmem:[#allocation5 + $0x98] sm:$0xff]
    %v157 = vld [vmem:[#allocation5 + $0xa0] sm:$0xff]
    %v158 = vld [vmem:[#allocation5 + $0xa8] sm:$0xff]
    %v159 = vld [vmem:[#allocation5 + $0xb0] sm:$0xff]
    %v160 = vld [vmem:[#allocation5 + $0xb8] sm:$0xff]
    %v161 = vld [vmem:[#allocation5 + $0xc0] sm:$0xff]
    %v162 = vld [vmem:[#allocation5 + $0xc8] sm:$0xff]
    %v163 = vld [vmem:[#allocation5 + $0xd0] sm:$0xff]
    %v164 = vld [vmem:[#allocation5 + $0xd8] sm:$0xff]
    %v165 = vld [vmem:[#allocation5 + $0xe0] sm:$0xff]
    %v166 = vld [vmem:[#allocation5 + $0xe8] sm:$0xff]
    %v167 = vld [vmem:[#allocation5 + $0xf0] sm:$0xff]
    %v168 = vld [vmem:[#allocation5 + $0xf8] sm:$0xff]
    %v169 = vld [vmem:[#allocation5 + $0x100] sm:$0xff]
    %v170 = vld [vmem:[#allocation5 + $0x108] sm:$0xff]
    %v171 = vld [vmem:[#allocation5 + $0x110] sm:$0xff]
    %v172 = vld [vmem:[#allocation5 + $0x118] sm:$0xff]
    %v173 = vld [vmem:[#allocation5 + $0x120] sm:$0xff]
    %v174 = vld [vmem:[#allocation5 + $0x128] sm:$0xff]
    %v175 = vld [vmem:[#allocation5 + $0x130] sm:$0xff]
    %v176 = vld [vmem:[#allocation5 + $0x138] sm:$0xff]
    %v177 = vld [vmem:[#allocation5 + $0x140] sm:$0xff]
    %v178 = vld [vmem:[#allocation5 + $0x148] sm:$0xff]
    %v179 = vld [vmem:[#allocation5 + $0x150] sm:$0xff]
    %v180 = vld [vmem:[#allocation5 + $0x158] sm:$0xff]
    %v181 = vld [vmem:[#allocation5 + $0x160] sm:$0xff]
    %v182 = vld [vmem:[#allocation5 + $0x168] sm:$0xff]
    %v183 = vld [vmem:[#allocation5 + $0x170] sm:$0xff]
    %v184 = vld [vmem:[#allocation5 + $0x178] sm:$0xff]
    %v185 = vld [vmem:[#allocation5 + $0x180] sm:$0xff]
    %v186 = vld [vmem:[#allocation5 + $0x188] sm:$0xff]
    %v187 = vld [vmem:[#allocation5 + $0x190] sm:$0xff]
    %v188 = vld [vmem:[#allocation5 + $0x198] sm:$0xff]
    %v189 = vld [vmem:[#allocation5 + $0x1a0] sm:$0xff]
    %v190 = vld [vmem:[#allocation5 + $0x1a8] sm:$0xff]
    %v191 = vld [vmem:[#allocation5 + $0x1b0] sm:$0xff]
    %v192 = vld [vmem:[#allocation5 + $0x1b8] sm:$0xff]
    %v193 = vld [vmem:[#allocation5 + $0x1c0] sm:$0xff]
    %v194 = vld [vmem:[#allocation5 + $0x1c8] sm:$0xff]
    %v195 = vld [vmem:[#allocation5 + $0x1d0] sm:$0xff]
    %v196 = vld [vmem:[#allocation5 + $0x1d8] sm:$0xff]
    %v197 = vld [vmem:[#allocation5 + $0x1e0] sm:$0xff]
    %v198 = vld [vmem:[#allocation5 + $0x1e8] sm:$0xff]
    %v199 = vld [vmem:[#allocation5 + $0x1f0] sm:$0xff]
    %v200 = vld [vmem:[#allocation5 + $0x1f8] sm:$0xff]
    %v201 = vld [vmem:[#allocation5 + $0x200] sm:$0xff]
    %v202 = vld [vmem:[#allocation5 + $0x208] sm:$0xff]
    %v203 = vld [vmem:[#allocation5 + $0x210] sm:$0xff]
    %v204 = vld [vmem:[#allocation5 + $0x218] sm:$0xff]
    %v205 = vld [vmem:[#allocation5 + $0x220] sm:$0xff]
    %v206 = vld [vmem:[#allocation5 + $0x228] sm:$0xff]
    %v207 = vld [vmem:[#allocation5 + $0x230] sm:$0xff]
    %v208 = vld [vmem:[#allocation5 + $0x238] sm:$0xff]
    %v209 = vld [vmem:[#allocation5 + $0x240] sm:$0xff]
    %v210 = vld [vmem:[#allocation5 + $0x248] sm:$0xff]
    %v211 = vld [vmem:[#allocation5 + $0x250] sm:$0xff]
    %v212 = vld [vmem:[#allocation5 + $0x258] sm:$0xff]
    %v213 = vld [vmem:[#allocation5 + $0x260] sm:$0xff]
    %v214 = vld [vmem:[#allocation5 + $0x268] sm:$0xff]
    %v215 = vld [vmem:[#allocation5 + $0x270] sm:$0xff]
    %v216 = vld [vmem:[#allocation5 + $0x278] sm:$0xff]
    %v217 = vld [vmem:[#allocation5 + $0x280] sm:$0xff]
    %v218 = vld [vmem:[#allocation5 + $0x288] sm:$0xff]
    %v219 = vld [vmem:[#allocation5 + $0x290] sm:$0xff]
    %v220 = vld [vmem:[#allocation5 + $0x298] sm:$0xff]
    %v221 = vld [vmem:[#allocation5 + $0x2a0] sm:$0xff]
    %v222 = vld [vmem:[#allocation5 + $0x2a8] sm:$0xff]
    %v223 = vld [vmem:[#allocation5 + $0x2b0] sm:$0xff]
    %v224 = vld [vmem:[#allocation5 + $0x2b8] sm:$0xff]
    %v225 = vld [vmem:[#allocation5 + $0x2c0] sm:$0xff]
    %v226 = vld [vmem:[#allocation5 + $0x2c8] sm:$0xff]
    %v227 = vld [vmem:[#allocation5 + $0x2d0] sm:$0xff]
    %v228 = vld [vmem:[#allocation5 + $0x2d8] sm:$0xff]
    %v229 = vld [vmem:[#allocation5 + $0x2e0] sm:$0xff]
    %v230 = vld [vmem:[#allocation5 + $0x2e8] sm:$0xff]
    %v231 = vld [vmem:[#allocation5 + $0x2f0] sm:$0xff]
    %v232 = vld [vmem:[#allocation5 + $0x2f8] sm:$0xff]
    %v233 = vld [vmem:[#allocation5 + $0x300] sm:$0xff]
    %v234 = vld [vmem:[#allocation5 + $0x308] sm:$0xff]
    %v235 = vld [vmem:[#allocation5 + $0x310] sm:$0xff]
    %v236 = vld [vmem:[#allocation5 + $0x318] sm:$0xff]
    %v237 = vld [vmem:[#allocation5 + $0x320] sm:$0xff]
    %v238 = vld [vmem:[#allocation5 + $0x328] sm:$0xff]
    %v239 = vld [vmem:[#allocation5 + $0x330] sm:$0xff]
    %v240 = vld [vmem:[#allocation5 + $0x338] sm:$0xff]
    %v241 = vld [vmem:[#allocation5 + $0x340] sm:$0xff]
    %v242 = vld [vmem:[#allocation5 + $0x348] sm:$0xff]
    %v243 = vld [vmem:[#allocation5 + $0x350] sm:$0xff]
    %v244 = vld [vmem:[#allocation5 + $0x358] sm:$0xff]
    %v245 = vld [vmem:[#allocation5 + $0x360] sm:$0xff]
    %v246 = vld [vmem:[#allocation5 + $0x368] sm:$0xff]
    %v247 = vld [vmem:[#allocation5 + $0x370] sm:$0xff]
    %v248 = vld [vmem:[#allocation5 + $0x378] sm:$0xff]
    %v249 = vld [vmem:[#allocation5 + $0x380] sm:$0xff]
    %v250 = vld [vmem:[#allocation5 + $0x388] sm:$0xff]
    %v251 = vld [vmem:[#allocation5 + $0x390] sm:$0xff]
    %v252 = vld [vmem:[#allocation5 + $0x398] sm:$0xff]
    %v253 = vld [vmem:[#allocation5 + $0x3a0] sm:$0xff]
    %v254 = vld [vmem:[#allocation5 + $0x3a8] sm:$0xff]
    %v255 = vld [vmem:[#allocation5 + $0x3b0] sm:$0xff]
    %v256 = vld [vmem:[#allocation5 + $0x3b8] sm:$0xff]
    %v257 = vld [vmem:[#allocation5 + $0x3c0] sm:$0xff]
    %v258 = vld [vmem:[#allocation5 + $0x3c8] sm:$0xff]
    %v259 = vld [vmem:[#allocation5 + $0x3d0] sm:$0xff]
    %v260 = vld [vmem:[#allocation5 + $0x3d8] sm:$0xff]
    %v261 = vld [vmem:[#allocation5 + $0x3e0] sm:$0xff]
    %v262 = vld [vmem:[#allocation5 + $0x3e8] sm:$0xff]
    %v263 = vld [vmem:[#allocation5 + $0x3f0] sm:$0xff]
    %v264 = vld [vmem:[#allocation5 + $0x3f8] sm:$0xff]
    %v265 = vld [vmem:[#allocation5 + $0x400] sm:$0xff]
    %v266 = vld [vmem:[#allocation5 + $0x408] sm:$0xff]
    %v267 = vld [vmem:[#allocation5 + $0x410] sm:$0xff]
    %v268 = vld [vmem:[#allocation5 + $0x418] sm:$0xff]
    %v269 = vld [vmem:[#allocation5 + $0x420] sm:$0xff]
    %v270 = vld [vmem:[#allocation5 + $0x428] sm:$0xff]
    %v271 = vld [vmem:[#allocation5 + $0x430] sm:$0xff]
    %v272 = vld [vmem:[#allocation5 + $0x438] sm:$0xff]
    %v273 = vld [vmem:[#allocation5 + $0x440] sm:$0xff]
    %v274 = vld [vmem:[#allocation5 + $0x448] sm:$0xff]
    %v275 = vld [vmem:[#allocation5 + $0x450] sm:$0xff]
    %v276 = vld [vmem:[#allocation5 + $0x458] sm:$0xff]
    %v277 = vld [vmem:[#allocation5 + $0x460] sm:$0xff]
    %v278 = vld [vmem:[#allocation5 + $0x468] sm:$0xff]
    %v279 = vld [vmem:[#allocation5 + $0x470] sm:$0xff]
    %v280 = vld [vmem:[#allocation5 + $0x478] sm:$0xff]
    %v281 = vld [vmem:[#allocation5 + $0x480] sm:$0xff]
    %v282 = vld [vmem:[#allocation5 + $0x488] sm:$0xff]
    %v283 = vld [vmem:[#allocation5 + $0x490] sm:$0xff]
    %v284 = vld [vmem:[#allocation5 + $0x498] sm:$0xff]
    %v285 = vld [vmem:[#allocation5 + $0x4a0] sm:$0xff]
    %v286 = vld [vmem:[#allocation5 + $0x4a8] sm:$0xff]
    %v287 = vld [vmem:[#allocation5 + $0x4b0] sm:$0xff]
    %v288 = vld [vmem:[#allocation5 + $0x4b8] sm:$0xff]
    %v289 = vld [vmem:[#allocation5 + $0x4c0] sm:$0xff]
    %v290 = vld [vmem:[#allocation5 + $0x4c8] sm:$0xff]
    %v291 = vld [vmem:[#allocation5 + $0x4d0] sm:$0xff]
    %v292 = vld [vmem:[#allocation5 + $0x4d8] sm:$0xff]
    %v293 = vld [vmem:[#allocation5 + $0x4e0] sm:$0xff]
    %v294 = vld [vmem:[#allocation5 + $0x4e8] sm:$0xff]
    %v295 = vld [vmem:[#allocation5 + $0x4f0] sm:$0xff]
    %v296 = vld [vmem:[#allocation5 + $0x4f8] sm:$0xff]
    %v297 = vld [vmem:[#allocation5 + $0x500] sm:$0xff]
    %v298 = vld [vmem:[#allocation5 + $0x508] sm:$0xff]
    %v299 = vld [vmem:[#allocation5 + $0x510] sm:$0xff]
    %v300 = vld [vmem:[#allocation5 + $0x518] sm:$0xff]
    %v301 = vld [vmem:[#allocation5 + $0x520] sm:$0xff]
    %v302 = vld [vmem:[#allocation5 + $0x528] sm:$0xff]
    %v303 = vld [vmem:[#allocation5 + $0x530] sm:$0xff]
    %v304 = vld [vmem:[#allocation5 + $0x538] sm:$0xff]
    %v305 = vld [vmem:[#allocation5 + $0x540] sm:$0xff]
    %v306 = vld [vmem:[#allocation5 + $0x548] sm:$0xff]
    %v307 = vld [vmem:[#allocation5 + $0x550] sm:$0xff]
    %v308 = vld [vmem:[#allocation5 + $0x558] sm:$0xff]
    %v309 = vld [vmem:[#allocation5 + $0x560] sm:$0xff]
    %v310 = vld [vmem:[#allocation5 + $0x568] sm:$0xff]
    %v311 = vld [vmem:[#allocation5 + $0x570] sm:$0xff]
    %v312 = vld [vmem:[#allocation5 + $0x578] sm:$0xff]
    %v313 = vld [vmem:[#allocation5 + $0x580] sm:$0xff]
    %v314 = vld [vmem:[#allocation5 + $0x588] sm:$0xff]
    %v315 = vld [vmem:[#allocation5 + $0x590] sm:$0xff]
    %v316 = vld [vmem:[#allocation5 + $0x598] sm:$0xff]
    %v317 = vld [vmem:[#allocation5 + $0x5a0] sm:$0xff]
    %v318 = vld [vmem:[#allocation5 + $0x5a8] sm:$0xff]
    %v319 = vld [vmem:[#allocation5 + $0x5b0] sm:$0xff]
    %v320 = vld [vmem:[#allocation5 + $0x5b8] sm:$0xff]
    %v321 = vld [vmem:[#allocation5 + $0x5c0] sm:$0xff]
    %v322 = vld [vmem:[#allocation5 + $0x5c8] sm:$0xff]
    %v323 = vld [vmem:[#allocation5 + $0x5d0] sm:$0xff]
    %v324 = vld [vmem:[#allocation5 + $0x5d8] sm:$0xff]
    %v325 = vld [vmem:[#allocation5 + $0x5e0] sm:$0xff]
    %v326 = vld [vmem:[#allocation5 + $0x5e8] sm:$0xff]
    %v327 = vld [vmem:[#allocation5 + $0x5f0] sm:$0xff]
    %v328 = vld [vmem:[#allocation5 + $0x5f8] sm:$0xff]
    %v329 = vld [vmem:[#allocation5 + $0x600] sm:$0xff]
    %v330 = vld [vmem:[#allocation5 + $0x608] sm:$0xff]
    %v331 = vld [vmem:[#allocation5 + $0x610] sm:$0xff]
    %v332 = vld [vmem:[#allocation5 + $0x618] sm:$0xff]
    %v333 = vld [vmem:[#allocation5 + $0x620] sm:$0xff]
    %v334 = vld [vmem:[#allocation5 + $0x628] sm:$0xff]
    %v335 = vld [vmem:[#allocation5 + $0x630] sm:$0xff]
    %v336 = vld [vmem:[#allocation5 + $0x638] sm:$0xff]
    %v337 = vld [vmem:[#allocation5 + $0x640] sm:$0xff]
    %v338 = vld [vmem:[#allocation5 + $0x648] sm:$0xff]
    %v339 = vld [vmem:[#allocation5 + $0x650] sm:$0xff]
    %v340 = vld [vmem:[#allocation5 + $0x658] sm:$0xff]
    %v341 = vld [vmem:[#allocation5 + $0x660] sm:$0xff]
    %v342 = vld [vmem:[#allocation5 + $0x668] sm:$0xff]
    %v343 = vld [vmem:[#allocation5 + $0x670] sm:$0xff]
    %v344 = vld [vmem:[#allocation5 + $0x678] sm:$0xff]
    %v345 = vld [vmem:[#allocation5 + $0x680] sm:$0xff]
    %v346 = vld [vmem:[#allocation5 + $0x688] sm:$0xff]
    %v347 = vld [vmem:[#allocation5 + $0x690] sm:$0xff]
    %v348 = vld [vmem:[#allocation5 + $0x698] sm:$0xff]
    %v349 = vld [vmem:[#allocation5 + $0x6a0] sm:$0xff]
    %v350 = vld [vmem:[#allocation5 + $0x6a8] sm:$0xff]
    %v351 = vld [vmem:[#allocation5 + $0x6b0] sm:$0xff]
    %v352 = vld [vmem:[#allocation5 + $0x6b8] sm:$0xff]
    %v353 = vld [vmem:[#allocation5 + $0x6c0] sm:$0xff]
    %v354 = vld [vmem:[#allocation5 + $0x6c8] sm:$0xff]
    %v355 = vld [vmem:[#allocation5 + $0x6d0] sm:$0xff]
    %v356 = vld [vmem:[#allocation5 + $0x6d8] sm:$0xff]
    %v357 = vld [vmem:[#allocation5 + $0x6e0] sm:$0xff]
    %v358 = vld [vmem:[#allocation5 + $0x6e8] sm:$0xff]
    %v359 = vld [vmem:[#allocation5 + $0x6f0] sm:$0xff]
    %v360 = vld [vmem:[#allocation5 + $0x6f8] sm:$0xff]
    %v361 = vld [vmem:[#allocation5 + $0x700] sm:$0xff]
    %v362 = vld [vmem:[#allocation5 + $0x708] sm:$0xff]
    %v363 = vld [vmem:[#allocation5 + $0x710] sm:$0xff]
    %v364 = vld [vmem:[#allocation5 + $0x718] sm:$0xff]
    %v365 = vld [vmem:[#allocation5 + $0x720] sm:$0xff]
    %v366 = vld [vmem:[#allocation5 + $0x728] sm:$0xff]
    %v367 = vld [vmem:[#allocation5 + $0x730] sm:$0xff]
    %v368 = vld [vmem:[#allocation5 + $0x738] sm:$0xff]
    %v369 = vld [vmem:[#allocation5 + $0x740] sm:$0xff]
    %v370 = vld [vmem:[#allocation5 + $0x748] sm:$0xff]
    %v371 = vld [vmem:[#allocation5 + $0x750] sm:$0xff]
    %v372 = vld [vmem:[#allocation5 + $0x758] sm:$0xff]
    %v373 = vld [vmem:[#allocation5 + $0x760] sm:$0xff]
    %v374 = vld [vmem:[#allocation5 + $0x768] sm:$0xff]
    %v375 = vld [vmem:[#allocation5 + $0x770] sm:$0xff]
    %v376 = vld [vmem:[#allocation5 + $0x778] sm:$0xff]
    %v377 = vld [vmem:[#allocation5 + $0x780] sm:$0xff]
    %v378 = vld [vmem:[#allocation5 + $0x788] sm:$0xff]
    %v379 = vld [vmem:[#allocation5 + $0x790] sm:$0xff]
    %v380 = vld [vmem:[#allocation5 + $0x798] sm:$0xff]
    %v381 = vld [vmem:[#allocation5 + $0x7a0] sm:$0xff]
    %v382 = vld [vmem:[#allocation5 + $0x7a8] sm:$0xff]
    %v383 = vld [vmem:[#allocation5 + $0x7b0] sm:$0xff]
    %v384 = vld [vmem:[#allocation5 + $0x7b8] sm:$0xff]
    %v385 = vld [vmem:[#allocation5 + $0x7c0] sm:$0xff]
    %v386 = vld [vmem:[#allocation5 + $0x7c8] sm:$0xff]
    %v387 = vld [vmem:[#allocation5 + $0x7d0] sm:$0xff]
    %v388 = vld [vmem:[#allocation5 + $0x7d8] sm:$0xff]
    %v389 = vld [vmem:[#allocation5 + $0x7e0] sm:$0xff]
    %v390 = vld [vmem:[#allocation5 + $0x7e8] sm:$0xff]
    %v391 = vld [vmem:[#allocation5 + $0x7f0] sm:$0xff]
    %v392 = vld [vmem:[#allocation5 + $0x7f8] sm:$0xff]
    %v393 = vld [vmem:[#allocation7] sm:$0xf]
    %v395 = vperm.slane %v393, 0
    %v396 = vperm.slane %v393, 1
    %v397 = vperm.slane %v393, 2
    %v398 = vperm.slane %v393, 3
    %403 = vmatpush.msra.mxu0 %v197
    %404 = vmatpush.msra.mxu0 %v193
    %405 = vmatpush.msra.mxu0 %v189
    %406 = vmatpush.msra.mxu0 %v185
    %407 = vmatpush.msra.mxu0 %v181
    %408 = vmatpush.msra.mxu0 %v177
    %409 = vmatpush.msra.mxu0 %v173
    %410 = vmatpush.msra.mxu0 %v169
    %411 = vmatpush.msra.mxu0 %v165
    %412 = vmatpush.msra.mxu0 %v161
    %413 = vmatpush.msra.mxu0 %v157
    %414 = vmatpush.msra.mxu0 %v153
    %415 = vmatpush.msra.mxu0 %v149
    %416 = vmatpush.msra.mxu0 %v145
    %417 = vmatpush.msra.mxu0 %v141
    %418 = vmatpush.msra.mxu0 %v137
    %419 = vmatmul.f32.gmra.mxu0 %v133
    %v420 = vpop.f32.mrf.mxu0
    %v421 = vadd.f32 %v395, %v420
    %422 = vdwg.mxu0
    %423 = vmatpush.msra.mxu0 %v261
    %424 = vmatpush.msra.mxu0 %v257
    %425 = vmatpush.msra.mxu0 %v253
    %426 = vmatpush.msra.mxu0 %v249
    %427 = vmatpush.msra.mxu0 %v245
    %428 = vmatpush.msra.mxu0 %v241
    %429 = vmatpush.msra.mxu0 %v237
    %430 = vmatpush.msra.mxu0 %v233
    %431 = vmatpush.msra.mxu0 %v229
    %432 = vmatpush.msra.mxu0 %v225
    %433 = vmatpush.msra.mxu0 %v221
    %434 = vmatpush.msra.mxu0 %v217
    %435 = vmatpush.msra.mxu0 %v213
    %436 = vmatpush.msra.mxu0 %v209
    %437 = vmatpush.msra.mxu0 %v205
    %438 = vmatpush.msra.mxu0 %v201
    %439 = vmatmul.f32.gmra.mxu0 %v134
    %v440 = vpop.f32.mrf.mxu0
    %v441 = vadd.f32 %v421, %v440
    %442 = vdwg.mxu0
    %443 = vmatpush.msra.mxu0 %v325
    %444 = vmatpush.msra.mxu0 %v321
    %445 = vmatpush.msra.mxu0 %v317
    %446 = vmatpush.msra.mxu0 %v313
    %447 = vmatpush.msra.mxu0 %v309
    %448 = vmatpush.msra.mxu0 %v305
    %449 = vmatpush.msra.mxu0 %v301
    %450 = vmatpush.msra.mxu0 %v297
    %451 = vmatpush.msra.mxu0 %v293
    %452 = vmatpush.msra.mxu0 %v289
    %453 = vmatpush.msra.mxu0 %v285
    %454 = vmatpush.msra.mxu0 %v281
    %455 = vmatpush.msra.mxu0 %v277
    %456 = vmatpush.msra.mxu0 %v273
    %457 = vmatpush.msra.mxu0 %v269
    %458 = vmatpush.msra.mxu0 %v265
    %459 = vmatmul.f32.gmra.mxu0 %v135
    %v460 = vpop.f32.mrf.mxu0
    %v461 = vadd.f32 %v441, %v460
    %462 = vdwg.mxu0
    %463 = vmatpush.msra.mxu0 %v389
    %464 = vmatpush.msra.mxu0 %v385
    %465 = vmatpush.msra.mxu0 %v381
    %466 = vmatpush.msra.mxu0 %v377
    %467 = vmatpush.msra.mxu0 %v373
    %468 = vmatpush.msra.mxu0 %v369
    %469 = vmatpush.msra.mxu0 %v365
    %470 = vmatpush.msra.mxu0 %v361
    %471 = vmatpush.msra.mxu0 %v357
    %472 = vmatpush.msra.mxu0 %v353
    %473 = vmatpush.msra.mxu0 %v349
    %474 = vmatpush.msra.mxu0 %v345
    %475 = vmatpush.msra.mxu0 %v341
    %476 = vmatpush.msra.mxu0 %v337
    %477 = vmatpush.msra.mxu0 %v333
    %478 = vmatpush.msra.mxu0 %v329
    %479 = vmatmul.f32.gmra.mxu0 %v136
    %v480 = vpop.f32.mrf.mxu0
    %v481 = vadd.f32 %v461, %v480
    %482 = vdwg.mxu0
    %483 = vmatpush.msra.mxu0 %v198
    %484 = vmatpush.msra.mxu0 %v194
    %485 = vmatpush.msra.mxu0 %v190
    %486 = vmatpush.msra.mxu0 %v186
    %487 = vmatpush.msra.mxu0 %v182
    %488 = vmatpush.msra.mxu0 %v178
    %489 = vmatpush.msra.mxu0 %v174
    %490 = vmatpush.msra.mxu0 %v170
    %491 = vmatpush.msra.mxu0 %v166
    %492 = vmatpush.msra.mxu0 %v162
    %493 = vmatpush.msra.mxu0 %v158
    %494 = vmatpush.msra.mxu0 %v154
    %495 = vmatpush.msra.mxu0 %v150
    %496 = vmatpush.msra.mxu0 %v146
    %497 = vmatpush.msra.mxu0 %v142
    %498 = vmatpush.msra.mxu0 %v138
    %499 = vmatmul.f32.gmra.mxu0 %v133
    %v500 = vpop.f32.mrf.mxu0
    %v501 = vadd.f32 %v396, %v500
    %502 = vdwg.mxu0
    %503 = vmatpush.msra.mxu0 %v262
    %504 = vmatpush.msra.mxu0 %v258
    %505 = vmatpush.msra.mxu0 %v254
    %506 = vmatpush.msra.mxu0 %v250
    %507 = vmatpush.msra.mxu0 %v246
    %508 = vmatpush.msra.mxu0 %v242
    %509 = vmatpush.msra.mxu0 %v238
    %510 = vmatpush.msra.mxu0 %v234
    %511 = vmatpush.msra.mxu0 %v230
    %512 = vmatpush.msra.mxu0 %v226
    %513 = vmatpush.msra.mxu0 %v222
    %514 = vmatpush.msra.mxu0 %v218
    %515 = vmatpush.msra.mxu0 %v214
    %516 = vmatpush.msra.mxu0 %v210
    %517 = vmatpush.msra.mxu0 %v206
    %518 = vmatpush.msra.mxu0 %v202
    %519 = vmatmul.f32.gmra.mxu0 %v134
    %v520 = vpop.f32.mrf.mxu0
    %v521 = vadd.f32 %v501, %v520
    %522 = vdwg.mxu0
    %523 = vmatpush.msra.mxu0 %v326
    %524 = vmatpush.msra.mxu0 %v322
    %525 = vmatpush.msra.mxu0 %v318
    %526 = vmatpush.msra.mxu0 %v314
    %527 = vmatpush.msra.mxu0 %v310
    %528 = vmatpush.msra.mxu0 %v306
    %529 = vmatpush.msra.mxu0 %v302
    %530 = vmatpush.msra.mxu0 %v298
    %531 = vmatpush.msra.mxu0 %v294
    %532 = vmatpush.msra.mxu0 %v290
    %533 = vmatpush.msra.mxu0 %v286
    %534 = vmatpush.msra.mxu0 %v282
    %535 = vmatpush.msra.mxu0 %v278
    %536 = vmatpush.msra.mxu0 %v274
    %537 = vmatpush.msra.mxu0 %v270
    %538 = vmatpush.msra.mxu0 %v266
    %539 = vmatmul.f32.gmra.mxu0 %v135
    %v540 = vpop.f32.mrf.mxu0
    %v541 = vadd.f32 %v521, %v540
    %542 = vdwg.mxu0
    %543 = vmatpush.msra.mxu0 %v390
    %544 = vmatpush.msra.mxu0 %v386
    %545 = vmatpush.msra.mxu0 %v382
    %546 = vmatpush.msra.mxu0 %v378
    %547 = vmatpush.msra.mxu0 %v374
    %548 = vmatpush.msra.mxu0 %v370
    %549 = vmatpush.msra.mxu0 %v366
    %550 = vmatpush.msra.mxu0 %v362
    %551 = vmatpush.msra.mxu0 %v358
    %552 = vmatpush.msra.mxu0 %v354
    %553 = vmatpush.msra.mxu0 %v350
    %554 = vmatpush.msra.mxu0 %v346
    %555 = vmatpush.msra.mxu0 %v342
    %556 = vmatpush.msra.mxu0 %v338
    %557 = vmatpush.msra.mxu0 %v334
    %558 = vmatpush.msra.mxu0 %v330
    %559 = vmatmul.f32.gmra.mxu0 %v136
    %v560 = vpop.f32.mrf.mxu0
    %v561 = vadd.f32 %v541, %v560
    %562 = vdwg.mxu0
    %563 = vmatpush.msra.mxu0 %v199
    %564 = vmatpush.msra.mxu0 %v195
    %565 = vmatpush.msra.mxu0 %v191
    %566 = vmatpush.msra.mxu0 %v187
    %567 = vmatpush.msra.mxu0 %v183
    %568 = vmatpush.msra.mxu0 %v179
    %569 = vmatpush.msra.mxu0 %v175
    %570 = vmatpush.msra.mxu0 %v171
    %571 = vmatpush.msra.mxu0 %v167
    %572 = vmatpush.msra.mxu0 %v163
    %573 = vmatpush.msra.mxu0 %v159
    %574 = vmatpush.msra.mxu0 %v155
    %575 = vmatpush.msra.mxu0 %v151
    %576 = vmatpush.msra.mxu0 %v147
    %577 = vmatpush.msra.mxu0 %v143
    %578 = vmatpush.msra.mxu0 %v139
    %579 = vmatmul.f32.gmra.mxu0 %v133
    %v580 = vpop.f32.mrf.mxu0
    %v581 = vadd.f32 %v397, %v580
    %582 = vdwg.mxu0
    %583 = vmatpush.msra.mxu0 %v263
    %584 = vmatpush.msra.mxu0 %v259
    %585 = vmatpush.msra.mxu0 %v255
    %586 = vmatpush.msra.mxu0 %v251
    %587 = vmatpush.msra.mxu0 %v247
    %588 = vmatpush.msra.mxu0 %v243
    %589 = vmatpush.msra.mxu0 %v239
    %590 = vmatpush.msra.mxu0 %v235
    %591 = vmatpush.msra.mxu0 %v231
    %592 = vmatpush.msra.mxu0 %v227
    %593 = vmatpush.msra.mxu0 %v223
    %594 = vmatpush.msra.mxu0 %v219
    %595 = vmatpush.msra.mxu0 %v215
    %596 = vmatpush.msra.mxu0 %v211
    %597 = vmatpush.msra.mxu0 %v207
    %598 = vmatpush.msra.mxu0 %v203
    %599 = vmatmul.f32.gmra.mxu0 %v134
    %v600 = vpop.f32.mrf.mxu0
    %v601 = vadd.f32 %v581, %v600
    %602 = vdwg.mxu0
    %603 = vmatpush.msra.mxu0 %v327
    %604 = vmatpush.msra.mxu0 %v323
    %605 = vmatpush.msra.mxu0 %v319
    %606 = vmatpush.msra.mxu0 %v315
    %607 = vmatpush.msra.mxu0 %v311
    %608 = vmatpush.msra.mxu0 %v307
    %609 = vmatpush.msra.mxu0 %v303
    %610 = vmatpush.msra.mxu0 %v299
    %611 = vmatpush.msra.mxu0 %v295
    %612 = vmatpush.msra.mxu0 %v291
    %613 = vmatpush.msra.mxu0 %v287
    %614 = vmatpush.msra.mxu0 %v283
    %615 = vmatpush.msra.mxu0 %v279
    %616 = vmatpush.msra.mxu0 %v275
    %617 = vmatpush.msra.mxu0 %v271
    %618 = vmatpush.msra.mxu0 %v267
    %619 = vmatmul.f32.gmra.mxu0 %v135
    %v620 = vpop.f32.mrf.mxu0
    %v621 = vadd.f32 %v601, %v620
    %622 = vdwg.mxu0
    %623 = vmatpush.msra.mxu0 %v391
    %624 = vmatpush.msra.mxu0 %v387
    %625 = vmatpush.msra.mxu0 %v383
    %626 = vmatpush.msra.mxu0 %v379
    %627 = vmatpush.msra.mxu0 %v375
    %628 = vmatpush.msra.mxu0 %v371
    %629 = vmatpush.msra.mxu0 %v367
    %630 = vmatpush.msra.mxu0 %v363
    %631 = vmatpush.msra.mxu0 %v359
    %632 = vmatpush.msra.mxu0 %v355
    %633 = vmatpush.msra.mxu0 %v351
    %634 = vmatpush.msra.mxu0 %v347
    %635 = vmatpush.msra.mxu0 %v343
    %636 = vmatpush.msra.mxu0 %v339
    %637 = vmatpush.msra.mxu0 %v335
    %638 = vmatpush.msra.mxu0 %v331
    %639 = vmatmul.f32.gmra.mxu0 %v136
    %v640 = vpop.f32.mrf.mxu0
    %v641 = vadd.f32 %v621, %v640
    %642 = vdwg.mxu0
    %643 = vmatpush.msra.mxu0 %v200
    %644 = vmatpush.msra.mxu0 %v196
    %645 = vmatpush.msra.mxu0 %v192
    %646 = vmatpush.msra.mxu0 %v188
    %647 = vmatpush.msra.mxu0 %v184
    %648 = vmatpush.msra.mxu0 %v180
    %649 = vmatpush.msra.mxu0 %v176
    %650 = vmatpush.msra.mxu0 %v172
    %651 = vmatpush.msra.mxu0 %v168
    %652 = vmatpush.msra.mxu0 %v164
    %653 = vmatpush.msra.mxu0 %v160
    %654 = vmatpush.msra.mxu0 %v156
    %655 = vmatpush.msra.mxu0 %v152
    %656 = vmatpush.msra.mxu0 %v148
    %657 = vmatpush.msra.mxu0 %v144
    %658 = vmatpush.msra.mxu0 %v140
    %659 = vmatmul.f32.gmra.mxu0 %v133
    %v660 = vpop.f32.mrf.mxu0
    %v661 = vadd.f32 %v398, %v660
    %662 = vdwg.mxu0
    %663 = vmatpush.msra.mxu0 %v264
    %664 = vmatpush.msra.mxu0 %v260
    %665 = vmatpush.msra.mxu0 %v256
    %666 = vmatpush.msra.mxu0 %v252
    %667 = vmatpush.msra.mxu0 %v248
    %668 = vmatpush.msra.mxu0 %v244
    %669 = vmatpush.msra.mxu0 %v240
    %670 = vmatpush.msra.mxu0 %v236
    %671 = vmatpush.msra.mxu0 %v232
    %672 = vmatpush.msra.mxu0 %v228
    %673 = vmatpush.msra.mxu0 %v224
    %674 = vmatpush.msra.mxu0 %v220
    %675 = vmatpush.msra.mxu0 %v216
    %676 = vmatpush.msra.mxu0 %v212
    %677 = vmatpush.msra.mxu0 %v208
    %678 = vmatpush.msra.mxu0 %v204
    %679 = vmatmul.f32.gmra.mxu0 %v134
    %v680 = vpop.f32.mrf.mxu0
    %v681 = vadd.f32 %v661, %v680
    %682 = vdwg.mxu0
    %683 = vmatpush.msra.mxu0 %v328
    %684 = vmatpush.msra.mxu0 %v324
    %685 = vmatpush.msra.mxu0 %v320
    %686 = vmatpush.msra.mxu0 %v316
    %687 = vmatpush.msra.mxu0 %v312
    %688 = vmatpush.msra.mxu0 %v308
    %689 = vmatpush.msra.mxu0 %v304
    %690 = vmatpush.msra.mxu0 %v300
    %691 = vmatpush.msra.mxu0 %v296
    %692 = vmatpush.msra.mxu0 %v292
    %693 = vmatpush.msra.mxu0 %v288
    %694 = vmatpush.msra.mxu0 %v284
    %695 = vmatpush.msra.mxu0 %v280
    %696 = vmatpush.msra.mxu0 %v276
    %697 = vmatpush.msra.mxu0 %v272
    %698 = vmatpush.msra.mxu0 %v268
    %699 = vmatmul.f32.gmra.mxu0 %v135
    %v700 = vpop.f32.mrf.mxu0
    %v701 = vadd.f32 %v681, %v700
    %702 = vdwg.mxu0
    %703 = vmatpush.msra.mxu0 %v392
    %704 = vmatpush.msra.mxu0 %v388
    %705 = vmatpush.msra.mxu0 %v384
    %706 = vmatpush.msra.mxu0 %v380
    %707 = vmatpush.msra.mxu0 %v376
    %708 = vmatpush.msra.mxu0 %v372
    %709 = vmatpush.msra.mxu0 %v368
    %710 = vmatpush.msra.mxu0 %v364
    %711 = vmatpush.msra.mxu0 %v360
    %712 = vmatpush.msra.mxu0 %v356
    %713 = vmatpush.msra.mxu0 %v352
    %714 = vmatpush.msra.mxu0 %v348
    %715 = vmatpush.msra.mxu0 %v344
    %716 = vmatpush.msra.mxu0 %v340
    %717 = vmatpush.msra.mxu0 %v336
    %718 = vmatpush.msra.mxu0 %v332
    %719 = vmatmul.f32.gmra.mxu0 %v136
    %v720 = vpop.f32.mrf.mxu0
    %v721 = vadd.f32 %v701, %v720
    %722 = vdwg.mxu0
    %v723 = vxor.u32 %v481, 2147483648
    %v724 = vxor.u32 %v561, 2147483648
    %v725 = vxor.u32 %v641, 2147483648
    %v726 = vxor.u32 %v721, 2147483648
    %v727 = vmul.f32 %v723, 1.442695
    %v728 = vpow.pop %v727
    %v729 = vmul.f32 %v724, 1.442695
    %v730 = vpow.pop %v729
    %v731 = vmul.f32 %v725, 1.442695
    %v732 = vpow.pop %v731
    %v733 = vmul.f32 %v726, 1.442695
    %v734 = vpow.pop %v733
    %v735 = vadd.f32 %v728, 1.0
    %v736 = vadd.f32 %v730, 1.0
    %v737 = vadd.f32 %v732, 1.0
    %v738 = vadd.f32 %v734, 1.0
    %v739 = vrcp.pop %v735
    %v740 = vmul.f32 %v735, %v739
    %v741 = vsub.f32 1.0, %v740
    %v742 = vmul.f32 %v739, %v741
    %v743 = vadd.f32 %v739, %v742
    %vm744 = vweird.f32 %v735
    %vm745 = vweird.f32 %v739
    %vm746 = vmor %vm744, %vm745
    %v747 = vsel %vm746, %v739, %v743
    %v748 = vand.u32 2147483647, %v735
    %vm749 = vcmp.eq.f32.partialorder %v748, 8.507059e+37
    %v750 = vand.u32 %v735, 2147483648
    %v751 = vor.u32 1.1754944e-38, %v750
    %v752 = vsel %vm749, %v751, %v747
    %v753 = vmul.f32 1.0, %v752
    %v754 = vrcp.pop %v736
    %v755 = vmul.f32 %v736, %v754
    %v756 = vsub.f32 1.0, %v755
    %v757 = vmul.f32 %v754, %v756
    %v758 = vadd.f32 %v754, %v757
    %vm759 = vweird.f32 %v736
    %vm760 = vweird.f32 %v754
    %vm761 = vmor %vm759, %vm760
    %v762 = vsel %vm761, %v754, %v758
    %v763 = vand.u32 2147483647, %v736
    %vm764 = vcmp.eq.f32.partialorder %v763, 8.507059e+37
    %v765 = vand.u32 %v736, 2147483648
    %v766 = vor.u32 1.1754944e-38, %v765
    %v767 = vsel %vm764, %v766, %v762
    %v768 = vmul.f32 1.0, %v767
    %v769 = vrcp.pop %v737
    %v770 = vmul.f32 %v737, %v769
    %v771 = vsub.f32 1.0, %v770
    %v772 = vmul.f32 %v769, %v771
    %v773 = vadd.f32 %v769, %v772
    %vm774 = vweird.f32 %v737
    %vm775 = vweird.f32 %v769
    %vm776 = vmor %vm774, %vm775
    %v777 = vsel %vm776, %v769, %v773
    %v778 = vand.u32 2147483647, %v737
    %vm779 = vcmp.eq.f32.partialorder %v778, 8.507059e+37
    %v780 = vand.u32 %v737, 2147483648
    %v781 = vor.u32 1.1754944e-38, %v780
    %v782 = vsel %vm779, %v781, %v777
    %v783 = vmul.f32 1.0, %v782
    %v784 = vrcp.pop %v738
    %v785 = vmul.f32 %v738, %v784
    %v786 = vsub.f32 1.0, %v785
    %v787 = vmul.f32 %v784, %v786
    %v788 = vadd.f32 %v784, %v787
    %vm789 = vweird.f32 %v738
    %vm790 = vweird.f32 %v784
    %vm791 = vmor %vm789, %vm790
    %v792 = vsel %vm791, %v784, %v788
    %v793 = vand.u32 2147483647, %v738
    %vm794 = vcmp.eq.f32.partialorder %v793, 8.507059e+37
    %v795 = vand.u32 %v738, 2147483648
    %v796 = vor.u32 1.1754944e-38, %v795
    %v797 = vsel %vm794, %v796, %v792
    %v798 = vmul.f32 1.0, %v797
    %v799 = vld [vmem:[#allocation8] sm:$0xff]
    %v800 = vld [vmem:[#allocation8 + $0x8] sm:$0xff]
    %v801 = vld [vmem:[#allocation8 + $0x10] sm:$0xff]
    %v802 = vld [vmem:[#allocation8 + $0x18] sm:$0xff]
    %v803 = vld [vmem:[#allocation8 + $0x20] sm:$0xff]
    %v804 = vld [vmem:[#allocation8 + $0x28] sm:$0xff]
    %v805 = vld [vmem:[#allocation8 + $0x30] sm:$0xff]
    %v806 = vld [vmem:[#allocation8 + $0x38] sm:$0xff]
    %v807 = vld [vmem:[#allocation8 + $0x40] sm:$0xff]
    %v808 = vld [vmem:[#allocation8 + $0x48] sm:$0xff]
    %v809 = vld [vmem:[#allocation8 + $0x50] sm:$0xff]
    %v810 = vld [vmem:[#allocation8 + $0x58] sm:$0xff]
    %v811 = vld [vmem:[#allocation8 + $0x60] sm:$0xff]
    %v812 = vld [vmem:[#allocation8 + $0x68] sm:$0xff]
    %v813 = vld [vmem:[#allocation8 + $0x70] sm:$0xff]
    %v814 = vld [vmem:[#allocation8 + $0x78] sm:$0xff]
    %v815 = vld [vmem:[#allocation8 + $0x80] sm:$0xff]
    %v816 = vld [vmem:[#allocation8 + $0x88] sm:$0xff]
    %v817 = vld [vmem:[#allocation8 + $0x90] sm:$0xff]
    %v818 = vld [vmem:[#allocation8 + $0x98] sm:$0xff]
    %v819 = vld [vmem:[#allocation8 + $0xa0] sm:$0xff]
    %v820 = vld [vmem:[#allocation8 + $0xa8] sm:$0xff]
    %v821 = vld [vmem:[#allocation8 + $0xb0] sm:$0xff]
    %v822 = vld [vmem:[#allocation8 + $0xb8] sm:$0xff]
    %v823 = vld [vmem:[#allocation8 + $0xc0] sm:$0xff]
    %v824 = vld [vmem:[#allocation8 + $0xc8] sm:$0xff]
    %v825 = vld [vmem:[#allocation8 + $0xd0] sm:$0xff]
    %v826 = vld [vmem:[#allocation8 + $0xd8] sm:$0xff]
    %v827 = vld [vmem:[#allocation8 + $0xe0] sm:$0xff]
    %v828 = vld [vmem:[#allocation8 + $0xe8] sm:$0xff]
    %v829 = vld [vmem:[#allocation8 + $0xf0] sm:$0xff]
    %v830 = vld [vmem:[#allocation8 + $0xf8] sm:$0xff]
    %v831 = vld [vmem:[#allocation8 + $0x100] sm:$0xff]
    %v832 = vld [vmem:[#allocation8 + $0x108] sm:$0xff]
    %v833 = vld [vmem:[#allocation8 + $0x110] sm:$0xff]
    %v834 = vld [vmem:[#allocation8 + $0x118] sm:$0xff]
    %v835 = vld [vmem:[#allocation8 + $0x120] sm:$0xff]
    %v836 = vld [vmem:[#allocation8 + $0x128] sm:$0xff]
    %v837 = vld [vmem:[#allocation8 + $0x130] sm:$0xff]
    %v838 = vld [vmem:[#allocation8 + $0x138] sm:$0xff]
    %v839 = vld [vmem:[#allocation8 + $0x140] sm:$0xff]
    %v840 = vld [vmem:[#allocation8 + $0x148] sm:$0xff]
    %v841 = vld [vmem:[#allocation8 + $0x150] sm:$0xff]
    %v842 = vld [vmem:[#allocation8 + $0x158] sm:$0xff]
    %v843 = vld [vmem:[#allocation8 + $0x160] sm:$0xff]
    %v844 = vld [vmem:[#allocation8 + $0x168] sm:$0xff]
    %v845 = vld [vmem:[#allocation8 + $0x170] sm:$0xff]
    %v846 = vld [vmem:[#allocation8 + $0x178] sm:$0xff]
    %v847 = vld [vmem:[#allocation8 + $0x180] sm:$0xff]
    %v848 = vld [vmem:[#allocation8 + $0x188] sm:$0xff]
    %v849 = vld [vmem:[#allocation8 + $0x190] sm:$0xff]
    %v850 = vld [vmem:[#allocation8 + $0x198] sm:$0xff]
    %v851 = vld [vmem:[#allocation8 + $0x1a0] sm:$0xff]
    %v852 = vld [vmem:[#allocation8 + $0x1a8] sm:$0xff]
    %v853 = vld [vmem:[#allocation8 + $0x1b0] sm:$0xff]
    %v854 = vld [vmem:[#allocation8 + $0x1b8] sm:$0xff]
    %v855 = vld [vmem:[#allocation8 + $0x1c0] sm:$0xff]
    %v856 = vld [vmem:[#allocation8 + $0x1c8] sm:$0xff]
    %v857 = vld [vmem:[#allocation8 + $0x1d0] sm:$0xff]
    %v858 = vld [vmem:[#allocation8 + $0x1d8] sm:$0xff]
    %v859 = vld [vmem:[#allocation8 + $0x1e0] sm:$0xff]
    %v860 = vld [vmem:[#allocation8 + $0x1e8] sm:$0xff]
    %v861 = vld [vmem:[#allocation8 + $0x1f0] sm:$0xff]
    %v862 = vld [vmem:[#allocation8 + $0x1f8] sm:$0xff]
    %v863 = vld [vmem:[#allocation8 + $0x200] sm:$0xff]
    %v864 = vld [vmem:[#allocation8 + $0x208] sm:$0xff]
    %v865 = vld [vmem:[#allocation8 + $0x210] sm:$0xff]
    %v866 = vld [vmem:[#allocation8 + $0x218] sm:$0xff]
    %v867 = vld [vmem:[#allocation8 + $0x220] sm:$0xff]
    %v868 = vld [vmem:[#allocation8 + $0x228] sm:$0xff]
    %v869 = vld [vmem:[#allocation8 + $0x230] sm:$0xff]
    %v870 = vld [vmem:[#allocation8 + $0x238] sm:$0xff]
    %v871 = vld [vmem:[#allocation8 + $0x240] sm:$0xff]
    %v872 = vld [vmem:[#allocation8 + $0x248] sm:$0xff]
    %v873 = vld [vmem:[#allocation8 + $0x250] sm:$0xff]
    %v874 = vld [vmem:[#allocation8 + $0x258] sm:$0xff]
    %v875 = vld [vmem:[#allocation8 + $0x260] sm:$0xff]
    %v876 = vld [vmem:[#allocation8 + $0x268] sm:$0xff]
    %v877 = vld [vmem:[#allocation8 + $0x270] sm:$0xff]
    %v878 = vld [vmem:[#allocation8 + $0x278] sm:$0xff]
    %v879 = vld [vmem:[#allocation8 + $0x280] sm:$0xff]
    %v880 = vld [vmem:[#allocation8 + $0x288] sm:$0xff]
    %v881 = vld [vmem:[#allocation8 + $0x290] sm:$0xff]
    %v882 = vld [vmem:[#allocation8 + $0x298] sm:$0xff]
    %v883 = vld [vmem:[#allocation8 + $0x2a0] sm:$0xff]
    %v884 = vld [vmem:[#allocation8 + $0x2a8] sm:$0xff]
    %v885 = vld [vmem:[#allocation8 + $0x2b0] sm:$0xff]
    %v886 = vld [vmem:[#allocation8 + $0x2b8] sm:$0xff]
    %v887 = vld [vmem:[#allocation8 + $0x2c0] sm:$0xff]
    %v888 = vld [vmem:[#allocation8 + $0x2c8] sm:$0xff]
    %v889 = vld [vmem:[#allocation8 + $0x2d0] sm:$0xff]
    %v890 = vld [vmem:[#allocation8 + $0x2d8] sm:$0xff]
    %v891 = vld [vmem:[#allocation8 + $0x2e0] sm:$0xff]
    %v892 = vld [vmem:[#allocation8 + $0x2e8] sm:$0xff]
    %v893 = vld [vmem:[#allocation8 + $0x2f0] sm:$0xff]
    %v894 = vld [vmem:[#allocation8 + $0x2f8] sm:$0xff]
    %v895 = vld [vmem:[#allocation8 + $0x300] sm:$0xff]
    %v896 = vld [vmem:[#allocation8 + $0x308] sm:$0xff]
    %v897 = vld [vmem:[#allocation8 + $0x310] sm:$0xff]
    %v898 = vld [vmem:[#allocation8 + $0x318] sm:$0xff]
    %v899 = vld [vmem:[#allocation8 + $0x320] sm:$0xff]
    %v900 = vld [vmem:[#allocation8 + $0x328] sm:$0xff]
    %v901 = vld [vmem:[#allocation8 + $0x330] sm:$0xff]
    %v902 = vld [vmem:[#allocation8 + $0x338] sm:$0xff]
    %v903 = vld [vmem:[#allocation8 + $0x340] sm:$0xff]
    %v904 = vld [vmem:[#allocation8 + $0x348] sm:$0xff]
    %v905 = vld [vmem:[#allocation8 + $0x350] sm:$0xff]
    %v906 = vld [vmem:[#allocation8 + $0x358] sm:$0xff]
    %v907 = vld [vmem:[#allocation8 + $0x360] sm:$0xff]
    %v908 = vld [vmem:[#allocation8 + $0x368] sm:$0xff]
    %v909 = vld [vmem:[#allocation8 + $0x370] sm:$0xff]
    %v910 = vld [vmem:[#allocation8 + $0x378] sm:$0xff]
    %v911 = vld [vmem:[#allocation8 + $0x380] sm:$0xff]
    %v912 = vld [vmem:[#allocation8 + $0x388] sm:$0xff]
    %v913 = vld [vmem:[#allocation8 + $0x390] sm:$0xff]
    %v914 = vld [vmem:[#allocation8 + $0x398] sm:$0xff]
    %v915 = vld [vmem:[#allocation8 + $0x3a0] sm:$0xff]
    %v916 = vld [vmem:[#allocation8 + $0x3a8] sm:$0xff]
    %v917 = vld [vmem:[#allocation8 + $0x3b0] sm:$0xff]
    %v918 = vld [vmem:[#allocation8 + $0x3b8] sm:$0xff]
    %v919 = vld [vmem:[#allocation8 + $0x3c0] sm:$0xff]
    %v920 = vld [vmem:[#allocation8 + $0x3c8] sm:$0xff]
    %v921 = vld [vmem:[#allocation8 + $0x3d0] sm:$0xff]
    %v922 = vld [vmem:[#allocation8 + $0x3d8] sm:$0xff]
    %v923 = vld [vmem:[#allocation8 + $0x3e0] sm:$0xff]
    %v924 = vld [vmem:[#allocation8 + $0x3e8] sm:$0xff]
    %v925 = vld [vmem:[#allocation8 + $0x3f0] sm:$0xff]
    %v926 = vld [vmem:[#allocation8 + $0x3f8] sm:$0xff]
    %v927 = vld [vmem:[#allocation8 + $0x400] sm:$0xff]
    %v928 = vld [vmem:[#allocation8 + $0x408] sm:$0xff]
    %v929 = vld [vmem:[#allocation8 + $0x410] sm:$0xff]
    %v930 = vld [vmem:[#allocation8 + $0x418] sm:$0xff]
    %v931 = vld [vmem:[#allocation8 + $0x420] sm:$0xff]
    %v932 = vld [vmem:[#allocation8 + $0x428] sm:$0xff]
    %v933 = vld [vmem:[#allocation8 + $0x430] sm:$0xff]
    %v934 = vld [vmem:[#allocation8 + $0x438] sm:$0xff]
    %v935 = vld [vmem:[#allocation8 + $0x440] sm:$0xff]
    %v936 = vld [vmem:[#allocation8 + $0x448] sm:$0xff]
    %v937 = vld [vmem:[#allocation8 + $0x450] sm:$0xff]
    %v938 = vld [vmem:[#allocation8 + $0x458] sm:$0xff]
    %v939 = vld [vmem:[#allocation8 + $0x460] sm:$0xff]
    %v940 = vld [vmem:[#allocation8 + $0x468] sm:$0xff]
    %v941 = vld [vmem:[#allocation8 + $0x470] sm:$0xff]
    %v942 = vld [vmem:[#allocation8 + $0x478] sm:$0xff]
    %v943 = vld [vmem:[#allocation8 + $0x480] sm:$0xff]
    %v944 = vld [vmem:[#allocation8 + $0x488] sm:$0xff]
    %v945 = vld [vmem:[#allocation8 + $0x490] sm:$0xff]
    %v946 = vld [vmem:[#allocation8 + $0x498] sm:$0xff]
    %v947 = vld [vmem:[#allocation8 + $0x4a0] sm:$0xff]
    %v948 = vld [vmem:[#allocation8 + $0x4a8] sm:$0xff]
    %v949 = vld [vmem:[#allocation8 + $0x4b0] sm:$0xff]
    %v950 = vld [vmem:[#allocation8 + $0x4b8] sm:$0xff]
    %v951 = vld [vmem:[#allocation8 + $0x4c0] sm:$0xff]
    %v952 = vld [vmem:[#allocation8 + $0x4c8] sm:$0xff]
    %v953 = vld [vmem:[#allocation8 + $0x4d0] sm:$0xff]
    %v954 = vld [vmem:[#allocation8 + $0x4d8] sm:$0xff]
    %v955 = vld [vmem:[#allocation8 + $0x4e0] sm:$0xff]
    %v956 = vld [vmem:[#allocation8 + $0x4e8] sm:$0xff]
    %v957 = vld [vmem:[#allocation8 + $0x4f0] sm:$0xff]
    %v958 = vld [vmem:[#allocation8 + $0x4f8] sm:$0xff]
    %v959 = vld [vmem:[#allocation8 + $0x500] sm:$0xff]
    %v960 = vld [vmem:[#allocation8 + $0x508] sm:$0xff]
    %v961 = vld [vmem:[#allocation8 + $0x510] sm:$0xff]
    %v962 = vld [vmem:[#allocation8 + $0x518] sm:$0xff]
    %v963 = vld [vmem:[#allocation8 + $0x520] sm:$0xff]
    %v964 = vld [vmem:[#allocation8 + $0x528] sm:$0xff]
    %v965 = vld [vmem:[#allocation8 + $0x530] sm:$0xff]
    %v966 = vld [vmem:[#allocation8 + $0x538] sm:$0xff]
    %v967 = vld [vmem:[#allocation8 + $0x540] sm:$0xff]
    %v968 = vld [vmem:[#allocation8 + $0x548] sm:$0xff]
    %v969 = vld [vmem:[#allocation8 + $0x550] sm:$0xff]
    %v970 = vld [vmem:[#allocation8 + $0x558] sm:$0xff]
    %v971 = vld [vmem:[#allocation8 + $0x560] sm:$0xff]
    %v972 = vld [vmem:[#allocation8 + $0x568] sm:$0xff]
    %v973 = vld [vmem:[#allocation8 + $0x570] sm:$0xff]
    %v974 = vld [vmem:[#allocation8 + $0x578] sm:$0xff]
    %v975 = vld [vmem:[#allocation8 + $0x580] sm:$0xff]
    %v976 = vld [vmem:[#allocation8 + $0x588] sm:$0xff]
    %v977 = vld [vmem:[#allocation8 + $0x590] sm:$0xff]
    %v978 = vld [vmem:[#allocation8 + $0x598] sm:$0xff]
    %v979 = vld [vmem:[#allocation8 + $0x5a0] sm:$0xff]
    %v980 = vld [vmem:[#allocation8 + $0x5a8] sm:$0xff]
    %v981 = vld [vmem:[#allocation8 + $0x5b0] sm:$0xff]
    %v982 = vld [vmem:[#allocation8 + $0x5b8] sm:$0xff]
    %v983 = vld [vmem:[#allocation8 + $0x5c0] sm:$0xff]
    %v984 = vld [vmem:[#allocation8 + $0x5c8] sm:$0xff]
    %v985 = vld [vmem:[#allocation8 + $0x5d0] sm:$0xff]
    %v986 = vld [vmem:[#allocation8 + $0x5d8] sm:$0xff]
    %v987 = vld [vmem:[#allocation8 + $0x5e0] sm:$0xff]
    %v988 = vld [vmem:[#allocation8 + $0x5e8] sm:$0xff]
    %v989 = vld [vmem:[#allocation8 + $0x5f0] sm:$0xff]
    %v990 = vld [vmem:[#allocation8 + $0x5f8] sm:$0xff]
    %v991 = vld [vmem:[#allocation8 + $0x600] sm:$0xff]
    %v992 = vld [vmem:[#allocation8 + $0x608] sm:$0xff]
    %v993 = vld [vmem:[#allocation8 + $0x610] sm:$0xff]
    %v994 = vld [vmem:[#allocation8 + $0x618] sm:$0xff]
    %v995 = vld [vmem:[#allocation8 + $0x620] sm:$0xff]
    %v996 = vld [vmem:[#allocation8 + $0x628] sm:$0xff]
    %v997 = vld [vmem:[#allocation8 + $0x630] sm:$0xff]
    %v998 = vld [vmem:[#allocation8 + $0x638] sm:$0xff]
    %v999 = vld [vmem:[#allocation8 + $0x640] sm:$0xff]
    %v1000 = vld [vmem:[#allocation8 + $0x648] sm:$0xff]
    %v1001 = vld [vmem:[#allocation8 + $0x650] sm:$0xff]
    %v1002 = vld [vmem:[#allocation8 + $0x658] sm:$0xff]
    %v1003 = vld [vmem:[#allocation8 + $0x660] sm:$0xff]
    %v1004 = vld [vmem:[#allocation8 + $0x668] sm:$0xff]
    %v1005 = vld [vmem:[#allocation8 + $0x670] sm:$0xff]
    %v1006 = vld [vmem:[#allocation8 + $0x678] sm:$0xff]
    %v1007 = vld [vmem:[#allocation8 + $0x680] sm:$0xff]
    %v1008 = vld [vmem:[#allocation8 + $0x688] sm:$0xff]
    %v1009 = vld [vmem:[#allocation8 + $0x690] sm:$0xff]
    %v1010 = vld [vmem:[#allocation8 + $0x698] sm:$0xff]
    %v1011 = vld [vmem:[#allocation8 + $0x6a0] sm:$0xff]
    %v1012 = vld [vmem:[#allocation8 + $0x6a8] sm:$0xff]
    %v1013 = vld [vmem:[#allocation8 + $0x6b0] sm:$0xff]
    %v1014 = vld [vmem:[#allocation8 + $0x6b8] sm:$0xff]
    %v1015 = vld [vmem:[#allocation8 + $0x6c0] sm:$0xff]
    %v1016 = vld [vmem:[#allocation8 + $0x6c8] sm:$0xff]
    %v1017 = vld [vmem:[#allocation8 + $0x6d0] sm:$0xff]
    %v1018 = vld [vmem:[#allocation8 + $0x6d8] sm:$0xff]
    %v1019 = vld [vmem:[#allocation8 + $0x6e0] sm:$0xff]
    %v1020 = vld [vmem:[#allocation8 + $0x6e8] sm:$0xff]
    %v1021 = vld [vmem:[#allocation8 + $0x6f0] sm:$0xff]
    %v1022 = vld [vmem:[#allocation8 + $0x6f8] sm:$0xff]
    %v1023 = vld [vmem:[#allocation8 + $0x700] sm:$0xff]
    %v1024 = vld [vmem:[#allocation8 + $0x708] sm:$0xff]
    %v1025 = vld [vmem:[#allocation8 + $0x710] sm:$0xff]
    %v1026 = vld [vmem:[#allocation8 + $0x718] sm:$0xff]
    %v1027 = vld [vmem:[#allocation8 + $0x720] sm:$0xff]
    %v1028 = vld [vmem:[#allocation8 + $0x728] sm:$0xff]
    %v1029 = vld [vmem:[#allocation8 + $0x730] sm:$0xff]
    %v1030 = vld [vmem:[#allocation8 + $0x738] sm:$0xff]
    %v1031 = vld [vmem:[#allocation8 + $0x740] sm:$0xff]
    %v1032 = vld [vmem:[#allocation8 + $0x748] sm:$0xff]
    %v1033 = vld [vmem:[#allocation8 + $0x750] sm:$0xff]
    %v1034 = vld [vmem:[#allocation8 + $0x758] sm:$0xff]
    %v1035 = vld [vmem:[#allocation8 + $0x760] sm:$0xff]
    %v1036 = vld [vmem:[#allocation8 + $0x768] sm:$0xff]
    %v1037 = vld [vmem:[#allocation8 + $0x770] sm:$0xff]
    %v1038 = vld [vmem:[#allocation8 + $0x778] sm:$0xff]
    %v1039 = vld [vmem:[#allocation8 + $0x780] sm:$0xff]
    %v1040 = vld [vmem:[#allocation8 + $0x788] sm:$0xff]
    %v1041 = vld [vmem:[#allocation8 + $0x790] sm:$0xff]
    %v1042 = vld [vmem:[#allocation8 + $0x798] sm:$0xff]
    %v1043 = vld [vmem:[#allocation8 + $0x7a0] sm:$0xff]
    %v1044 = vld [vmem:[#allocation8 + $0x7a8] sm:$0xff]
    %v1045 = vld [vmem:[#allocation8 + $0x7b0] sm:$0xff]
    %v1046 = vld [vmem:[#allocation8 + $0x7b8] sm:$0xff]
    %v1047 = vld [vmem:[#allocation8 + $0x7c0] sm:$0xff]
    %v1048 = vld [vmem:[#allocation8 + $0x7c8] sm:$0xff]
    %v1049 = vld [vmem:[#allocation8 + $0x7d0] sm:$0xff]
    %v1050 = vld [vmem:[#allocation8 + $0x7d8] sm:$0xff]
    %v1051 = vld [vmem:[#allocation8 + $0x7e0] sm:$0xff]
    %v1052 = vld [vmem:[#allocation8 + $0x7e8] sm:$0xff]
    %v1053 = vld [vmem:[#allocation8 + $0x7f0] sm:$0xff]
    %v1054 = vld [vmem:[#allocation8 + $0x7f8] sm:$0xff]
    %v1055 = vld [vmem:[#allocation10] sm:$0xf]
    %v1057 = vperm.slane %v1055, 0
    %v1058 = vperm.slane %v1055, 1
    %v1059 = vperm.slane %v1055, 2
    %v1060 = vperm.slane %v1055, 3
    %1065 = vmatpush.msra.mxu0 %v859
    %1066 = vmatpush.msra.mxu0 %v855
    %1067 = vmatpush.msra.mxu0 %v851
    %1068 = vmatpush.msra.mxu0 %v847
    %1069 = vmatpush.msra.mxu0 %v843
    %1070 = vmatpush.msra.mxu0 %v839
    %1071 = vmatpush.msra.mxu0 %v835
    %1072 = vmatpush.msra.mxu0 %v831
    %1073 = vmatpush.msra.mxu0 %v827
    %1074 = vmatpush.msra.mxu0 %v823
    %1075 = vmatpush.msra.mxu0 %v819
    %1076 = vmatpush.msra.mxu0 %v815
    %1077 = vmatpush.msra.mxu0 %v811
    %1078 = vmatpush.msra.mxu0 %v807
    %1079 = vmatpush.msra.mxu0 %v803
    %1080 = vmatpush.msra.mxu0 %v799
    %1081 = vmatmul.f32.gmra.mxu0 %v753
    %v1082 = vpop.f32.mrf.mxu0
    %v1083 = vadd.f32 %v1057, %v1082
    %1084 = vdwg.mxu0
    %1085 = vmatpush.msra.mxu0 %v923
    %1086 = vmatpush.msra.mxu0 %v919
    %1087 = vmatpush.msra.mxu0 %v915
    %1088 = vmatpush.msra.mxu0 %v911
    %1089 = vmatpush.msra.mxu0 %v907
    %1090 = vmatpush.msra.mxu0 %v903
    %1091 = vmatpush.msra.mxu0 %v899
    %1092 = vmatpush.msra.mxu0 %v895
    %1093 = vmatpush.msra.mxu0 %v891
    %1094 = vmatpush.msra.mxu0 %v887
    %1095 = vmatpush.msra.mxu0 %v883
    %1096 = vmatpush.msra.mxu0 %v879
    %1097 = vmatpush.msra.mxu0 %v875
    %1098 = vmatpush.msra.mxu0 %v871
    %1099 = vmatpush.msra.mxu0 %v867
    %1100 = vmatpush.msra.mxu0 %v863
    %1101 = vmatmul.f32.gmra.mxu0 %v768
    %v1102 = vpop.f32.mrf.mxu0
    %v1103 = vadd.f32 %v1083, %v1102
    %1104 = vdwg.mxu0
    %1105 = vmatpush.msra.mxu0 %v987
    %1106 = vmatpush.msra.mxu0 %v983
    %1107 = vmatpush.msra.mxu0 %v979
    %1108 = vmatpush.msra.mxu0 %v975
    %1109 = vmatpush.msra.mxu0 %v971
    %1110 = vmatpush.msra.mxu0 %v967
    %1111 = vmatpush.msra.mxu0 %v963
    %1112 = vmatpush.msra.mxu0 %v959
    %1113 = vmatpush.msra.mxu0 %v955
    %1114 = vmatpush.msra.mxu0 %v951
    %1115 = vmatpush.msra.mxu0 %v947
    %1116 = vmatpush.msra.mxu0 %v943
    %1117 = vmatpush.msra.mxu0 %v939
    %1118 = vmatpush.msra.mxu0 %v935
    %1119 = vmatpush.msra.mxu0 %v931
    %1120 = vmatpush.msra.mxu0 %v927
    %1121 = vmatmul.f32.gmra.mxu0 %v783
    %v1122 = vpop.f32.mrf.mxu0
    %v1123 = vadd.f32 %v1103, %v1122
    %1124 = vdwg.mxu0
    %1125 = vmatpush.msra.mxu0 %v1051
    %1126 = vmatpush.msra.mxu0 %v1047
    %1127 = vmatpush.msra.mxu0 %v1043
    %1128 = vmatpush.msra.mxu0 %v1039
    %1129 = vmatpush.msra.mxu0 %v1035
    %1130 = vmatpush.msra.mxu0 %v1031
    %1131 = vmatpush.msra.mxu0 %v1027
    %1132 = vmatpush.msra.mxu0 %v1023
    %1133 = vmatpush.msra.mxu0 %v1019
    %1134 = vmatpush.msra.mxu0 %v1015
    %1135 = vmatpush.msra.mxu0 %v1011
    %1136 = vmatpush.msra.mxu0 %v1007
    %1137 = vmatpush.msra.mxu0 %v1003
    %1138 = vmatpush.msra.mxu0 %v999
    %1139 = vmatpush.msra.mxu0 %v995
    %1140 = vmatpush.msra.mxu0 %v991
    %1141 = vmatmul.f32.gmra.mxu0 %v798
    %v1142 = vpop.f32.mrf.mxu0
    %v1143 = vadd.f32 %v1123, %v1142
    %1144 = vdwg.mxu0
    %1145 = vmatpush.msra.mxu0 %v860
    %1146 = vmatpush.msra.mxu0 %v856
    %1147 = vmatpush.msra.mxu0 %v852
    %1148 = vmatpush.msra.mxu0 %v848
    %1149 = vmatpush.msra.mxu0 %v844
    %1150 = vmatpush.msra.mxu0 %v840
    %1151 = vmatpush.msra.mxu0 %v836
    %1152 = vmatpush.msra.mxu0 %v832
    %1153 = vmatpush.msra.mxu0 %v828
    %1154 = vmatpush.msra.mxu0 %v824
    %1155 = vmatpush.msra.mxu0 %v820
    %1156 = vmatpush.msra.mxu0 %v816
    %1157 = vmatpush.msra.mxu0 %v812
    %1158 = vmatpush.msra.mxu0 %v808
    %1159 = vmatpush.msra.mxu0 %v804
    %1160 = vmatpush.msra.mxu0 %v800
    %1161 = vmatmul.f32.gmra.mxu0 %v753
    %v1162 = vpop.f32.mrf.mxu0
    %v1163 = vadd.f32 %v1058, %v1162
    %1164 = vdwg.mxu0
    %1165 = vmatpush.msra.mxu0 %v924
    %1166 = vmatpush.msra.mxu0 %v920
    %1167 = vmatpush.msra.mxu0 %v916
    %1168 = vmatpush.msra.mxu0 %v912
    %1169 = vmatpush.msra.mxu0 %v908
    %1170 = vmatpush.msra.mxu0 %v904
    %1171 = vmatpush.msra.mxu0 %v900
    %1172 = vmatpush.msra.mxu0 %v896
    %1173 = vmatpush.msra.mxu0 %v892
    %1174 = vmatpush.msra.mxu0 %v888
    %1175 = vmatpush.msra.mxu0 %v884
    %1176 = vmatpush.msra.mxu0 %v880
    %1177 = vmatpush.msra.mxu0 %v876
    %1178 = vmatpush.msra.mxu0 %v872
    %1179 = vmatpush.msra.mxu0 %v868
    %1180 = vmatpush.msra.mxu0 %v864
    %1181 = vmatmul.f32.gmra.mxu0 %v768
    %v1182 = vpop.f32.mrf.mxu0
    %v1183 = vadd.f32 %v1163, %v1182
    %1184 = vdwg.mxu0
    %1185 = vmatpush.msra.mxu0 %v988
    %1186 = vmatpush.msra.mxu0 %v984
    %1187 = vmatpush.msra.mxu0 %v980
    %1188 = vmatpush.msra.mxu0 %v976
    %1189 = vmatpush.msra.mxu0 %v972
    %1190 = vmatpush.msra.mxu0 %v968
    %1191 = vmatpush.msra.mxu0 %v964
    %1192 = vmatpush.msra.mxu0 %v960
    %1193 = vmatpush.msra.mxu0 %v956
    %1194 = vmatpush.msra.mxu0 %v952
    %1195 = vmatpush.msra.mxu0 %v948
    %1196 = vmatpush.msra.mxu0 %v944
    %1197 = vmatpush.msra.mxu0 %v940
    %1198 = vmatpush.msra.mxu0 %v936
    %1199 = vmatpush.msra.mxu0 %v932
    %1200 = vmatpush.msra.mxu0 %v928
    %1201 = vmatmul.f32.gmra.mxu0 %v783
    %v1202 = vpop.f32.mrf.mxu0
    %v1203 = vadd.f32 %v1183, %v1202
    %1204 = vdwg.mxu0
    %1205 = vmatpush.msra.mxu0 %v1052
    %1206 = vmatpush.msra.mxu0 %v1048
    %1207 = vmatpush.msra.mxu0 %v1044
    %1208 = vmatpush.msra.mxu0 %v1040
    %1209 = vmatpush.msra.mxu0 %v1036
    %1210 = vmatpush.msra.mxu0 %v1032
    %1211 = vmatpush.msra.mxu0 %v1028
    %1212 = vmatpush.msra.mxu0 %v1024
    %1213 = vmatpush.msra.mxu0 %v1020
    %1214 = vmatpush.msra.mxu0 %v1016
    %1215 = vmatpush.msra.mxu0 %v1012
    %1216 = vmatpush.msra.mxu0 %v1008
    %1217 = vmatpush.msra.mxu0 %v1004
    %1218 = vmatpush.msra.mxu0 %v1000
    %1219 = vmatpush.msra.mxu0 %v996
    %1220 = vmatpush.msra.mxu0 %v992
    %1221 = vmatmul.f32.gmra.mxu0 %v798
    %v1222 = vpop.f32.mrf.mxu0
    %v1223 = vadd.f32 %v1203, %v1222
    %1224 = vdwg.mxu0
    %1225 = vmatpush.msra.mxu0 %v861
    %1226 = vmatpush.msra.mxu0 %v857
    %1227 = vmatpush.msra.mxu0 %v853
    %1228 = vmatpush.msra.mxu0 %v849
    %1229 = vmatpush.msra.mxu0 %v845
    %1230 = vmatpush.msra.mxu0 %v841
    %1231 = vmatpush.msra.mxu0 %v837
    %1232 = vmatpush.msra.mxu0 %v833
    %1233 = vmatpush.msra.mxu0 %v829
    %1234 = vmatpush.msra.mxu0 %v825
    %1235 = vmatpush.msra.mxu0 %v821
    %1236 = vmatpush.msra.mxu0 %v817
    %1237 = vmatpush.msra.mxu0 %v813
    %1238 = vmatpush.msra.mxu0 %v809
    %1239 = vmatpush.msra.mxu0 %v805
    %1240 = vmatpush.msra.mxu0 %v801
    %1241 = vmatmul.f32.gmra.mxu0 %v753
    %v1242 = vpop.f32.mrf.mxu0
    %v1243 = vadd.f32 %v1059, %v1242
    %1244 = vdwg.mxu0
    %1245 = vmatpush.msra.mxu0 %v925
    %1246 = vmatpush.msra.mxu0 %v921
    %1247 = vmatpush.msra.mxu0 %v917
    %1248 = vmatpush.msra.mxu0 %v913
    %1249 = vmatpush.msra.mxu0 %v909
    %1250 = vmatpush.msra.mxu0 %v905
    %1251 = vmatpush.msra.mxu0 %v901
    %1252 = vmatpush.msra.mxu0 %v897
    %1253 = vmatpush.msra.mxu0 %v893
    %1254 = vmatpush.msra.mxu0 %v889
    %1255 = vmatpush.msra.mxu0 %v885
    %1256 = vmatpush.msra.mxu0 %v881
    %1257 = vmatpush.msra.mxu0 %v877
    %1258 = vmatpush.msra.mxu0 %v873
    %1259 = vmatpush.msra.mxu0 %v869
    %1260 = vmatpush.msra.mxu0 %v865
    %1261 = vmatmul.f32.gmra.mxu0 %v768
    %v1262 = vpop.f32.mrf.mxu0
    %v1263 = vadd.f32 %v1243, %v1262
    %1264 = vdwg.mxu0
    %1265 = vmatpush.msra.mxu0 %v989
    %1266 = vmatpush.msra.mxu0 %v985
    %1267 = vmatpush.msra.mxu0 %v981
    %1268 = vmatpush.msra.mxu0 %v977
    %1269 = vmatpush.msra.mxu0 %v973
    %1270 = vmatpush.msra.mxu0 %v969
    %1271 = vmatpush.msra.mxu0 %v965
    %1272 = vmatpush.msra.mxu0 %v961
    %1273 = vmatpush.msra.mxu0 %v957
    %1274 = vmatpush.msra.mxu0 %v953
    %1275 = vmatpush.msra.mxu0 %v949
    %1276 = vmatpush.msra.mxu0 %v945
    %1277 = vmatpush.msra.mxu0 %v941
    %1278 = vmatpush.msra.mxu0 %v937
    %1279 = vmatpush.msra.mxu0 %v933
    %1280 = vmatpush.msra.mxu0 %v929
    %1281 = vmatmul.f32.gmra.mxu0 %v783
    %v1282 = vpop.f32.mrf.mxu0
    %v1283 = vadd.f32 %v1263, %v1282
    %1284 = vdwg.mxu0
    %1285 = vmatpush.msra.mxu0 %v1053
    %1286 = vmatpush.msra.mxu0 %v1049
    %1287 = vmatpush.msra.mxu0 %v1045
    %1288 = vmatpush.msra.mxu0 %v1041
    %1289 = vmatpush.msra.mxu0 %v1037
    %1290 = vmatpush.msra.mxu0 %v1033
    %1291 = vmatpush.msra.mxu0 %v1029
    %1292 = vmatpush.msra.mxu0 %v1025
    %1293 = vmatpush.msra.mxu0 %v1021
    %1294 = vmatpush.msra.mxu0 %v1017
    %1295 = vmatpush.msra.mxu0 %v1013
    %1296 = vmatpush.msra.mxu0 %v1009
    %1297 = vmatpush.msra.mxu0 %v1005
    %1298 = vmatpush.msra.mxu0 %v1001
    %1299 = vmatpush.msra.mxu0 %v997
    %1300 = vmatpush.msra.mxu0 %v993
    %1301 = vmatmul.f32.gmra.mxu0 %v798
    %v1302 = vpop.f32.mrf.mxu0
    %v1303 = vadd.f32 %v1283, %v1302
    %1304 = vdwg.mxu0
    %1305 = vmatpush.msra.mxu0 %v862
    %1306 = vmatpush.msra.mxu0 %v858
    %1307 = vmatpush.msra.mxu0 %v854
    %1308 = vmatpush.msra.mxu0 %v850
    %1309 = vmatpush.msra.mxu0 %v846
    %1310 = vmatpush.msra.mxu0 %v842
    %1311 = vmatpush.msra.mxu0 %v838
    %1312 = vmatpush.msra.mxu0 %v834
    %1313 = vmatpush.msra.mxu0 %v830
    %1314 = vmatpush.msra.mxu0 %v826
    %1315 = vmatpush.msra.mxu0 %v822
    %1316 = vmatpush.msra.mxu0 %v818
    %1317 = vmatpush.msra.mxu0 %v814
    %1318 = vmatpush.msra.mxu0 %v810
    %1319 = vmatpush.msra.mxu0 %v806
    %1320 = vmatpush.msra.mxu0 %v802
    %1321 = vmatmul.f32.gmra.mxu0 %v753
    %v1322 = vpop.f32.mrf.mxu0
    %v1323 = vadd.f32 %v1060, %v1322
    %1324 = vdwg.mxu0
    %1325 = vmatpush.msra.mxu0 %v926
    %1326 = vmatpush.msra.mxu0 %v922
    %1327 = vmatpush.msra.mxu0 %v918
    %1328 = vmatpush.msra.mxu0 %v914
    %1329 = vmatpush.msra.mxu0 %v910
    %1330 = vmatpush.msra.mxu0 %v906
    %1331 = vmatpush.msra.mxu0 %v902
    %1332 = vmatpush.msra.mxu0 %v898
    %1333 = vmatpush.msra.mxu0 %v894
    %1334 = vmatpush.msra.mxu0 %v890
    %1335 = vmatpush.msra.mxu0 %v886
    %1336 = vmatpush.msra.mxu0 %v882
    %1337 = vmatpush.msra.mxu0 %v878
    %1338 = vmatpush.msra.mxu0 %v874
    %1339 = vmatpush.msra.mxu0 %v870
    %1340 = vmatpush.msra.mxu0 %v866
    %1341 = vmatmul.f32.gmra.mxu0 %v768
    %v1342 = vpop.f32.mrf.mxu0
    %v1343 = vadd.f32 %v1323, %v1342
    %1344 = vdwg.mxu0
    %1345 = vmatpush.msra.mxu0 %v990
    %1346 = vmatpush.msra.mxu0 %v986
    %1347 = vmatpush.msra.mxu0 %v982
    %1348 = vmatpush.msra.mxu0 %v978
    %1349 = vmatpush.msra.mxu0 %v974
    %1350 = vmatpush.msra.mxu0 %v970
    %1351 = vmatpush.msra.mxu0 %v966
    %1352 = vmatpush.msra.mxu0 %v962
    %1353 = vmatpush.msra.mxu0 %v958
    %1354 = vmatpush.msra.mxu0 %v954
    %1355 = vmatpush.msra.mxu0 %v950
    %1356 = vmatpush.msra.mxu0 %v946
    %1357 = vmatpush.msra.mxu0 %v942
    %1358 = vmatpush.msra.mxu0 %v938
    %1359 = vmatpush.msra.mxu0 %v934
    %1360 = vmatpush.msra.mxu0 %v930
    %1361 = vmatmul.f32.gmra.mxu0 %v783
    %v1362 = vpop.f32.mrf.mxu0
    %v1363 = vadd.f32 %v1343, %v1362
    %1364 = vdwg.mxu0
    %1365 = vmatpush.msra.mxu0 %v1054
    %1366 = vmatpush.msra.mxu0 %v1050
    %1367 = vmatpush.msra.mxu0 %v1046
    %1368 = vmatpush.msra.mxu0 %v1042
    %1369 = vmatpush.msra.mxu0 %v1038
    %1370 = vmatpush.msra.mxu0 %v1034
    %1371 = vmatpush.msra.mxu0 %v1030
    %1372 = vmatpush.msra.mxu0 %v1026
    %1373 = vmatpush.msra.mxu0 %v1022
    %1374 = vmatpush.msra.mxu0 %v1018
    %1375 = vmatpush.msra.mxu0 %v1014
    %1376 = vmatpush.msra.mxu0 %v1010
    %1377 = vmatpush.msra.mxu0 %v1006
    %1378 = vmatpush.msra.mxu0 %v1002
    %1379 = vmatpush.msra.mxu0 %v998
    %1380 = vmatpush.msra.mxu0 %v994
    %1381 = vmatmul.f32.gmra.mxu0 %v798
    %v1382 = vpop.f32.mrf.mxu0
    %v1383 = vadd.f32 %v1363, %v1382
    %1384 = vdwg.mxu0
    %v1385 = vxor.u32 %v1143, 2147483648
    %v1386 = vxor.u32 %v1223, 2147483648
    %v1387 = vxor.u32 %v1303, 2147483648
    %v1388 = vxor.u32 %v1383, 2147483648
    %v1389 = vmul.f32 %v1385, 1.442695
    %v1390 = vpow.pop %v1389
    %v1391 = vmul.f32 %v1386, 1.442695
    %v1392 = vpow.pop %v1391
    %v1393 = vmul.f32 %v1387, 1.442695
    %v1394 = vpow.pop %v1393
    %v1395 = vmul.f32 %v1388, 1.442695
    %v1396 = vpow.pop %v1395
    %v1397 = vadd.f32 %v1390, 1.0
    %v1398 = vadd.f32 %v1392, 1.0
    %v1399 = vadd.f32 %v1394, 1.0
    %v1400 = vadd.f32 %v1396, 1.0
    %v1401 = vrcp.pop %v1397
    %v1402 = vmul.f32 %v1397, %v1401
    %v1403 = vsub.f32 1.0, %v1402
    %v1404 = vmul.f32 %v1401, %v1403
    %v1405 = vadd.f32 %v1401, %v1404
    %vm1406 = vweird.f32 %v1397
    %vm1407 = vweird.f32 %v1401
    %vm1408 = vmor %vm1406, %vm1407
    %v1409 = vsel %vm1408, %v1401, %v1405
    %v1410 = vand.u32 2147483647, %v1397
    %vm1411 = vcmp.eq.f32.partialorder %v1410, 8.507059e+37
    %v1412 = vand.u32 %v1397, 2147483648
    %v1413 = vor.u32 1.1754944e-38, %v1412
    %v1414 = vsel %vm1411, %v1413, %v1409
    %v1415 = vmul.f32 1.0, %v1414
    %v1416 = vrcp.pop %v1398
    %v1417 = vmul.f32 %v1398, %v1416
    %v1418 = vsub.f32 1.0, %v1417
    %v1419 = vmul.f32 %v1416, %v1418
    %v1420 = vadd.f32 %v1416, %v1419
    %vm1421 = vweird.f32 %v1398
    %vm1422 = vweird.f32 %v1416
    %vm1423 = vmor %vm1421, %vm1422
    %v1424 = vsel %vm1423, %v1416, %v1420
    %v1425 = vand.u32 2147483647, %v1398
    %vm1426 = vcmp.eq.f32.partialorder %v1425, 8.507059e+37
    %v1427 = vand.u32 %v1398, 2147483648
    %v1428 = vor.u32 1.1754944e-38, %v1427
    %v1429 = vsel %vm1426, %v1428, %v1424
    %v1430 = vmul.f32 1.0, %v1429
    %v1431 = vrcp.pop %v1399
    %v1432 = vmul.f32 %v1399, %v1431
    %v1433 = vsub.f32 1.0, %v1432
    %v1434 = vmul.f32 %v1431, %v1433
    %v1435 = vadd.f32 %v1431, %v1434
    %vm1436 = vweird.f32 %v1399
    %vm1437 = vweird.f32 %v1431
    %vm1438 = vmor %vm1436, %vm1437
    %v1439 = vsel %vm1438, %v1431, %v1435
    %v1440 = vand.u32 2147483647, %v1399
    %vm1441 = vcmp.eq.f32.partialorder %v1440, 8.507059e+37
    %v1442 = vand.u32 %v1399, 2147483648
    %v1443 = vor.u32 1.1754944e-38, %v1442
    %v1444 = vsel %vm1441, %v1443, %v1439
    %v1445 = vmul.f32 1.0, %v1444
    %v1446 = vrcp.pop %v1400
    %v1447 = vmul.f32 %v1400, %v1446
    %v1448 = vsub.f32 1.0, %v1447
    %v1449 = vmul.f32 %v1446, %v1448
    %v1450 = vadd.f32 %v1446, %v1449
    %vm1451 = vweird.f32 %v1400
    %vm1452 = vweird.f32 %v1446
    %vm1453 = vmor %vm1451, %vm1452
    %v1454 = vsel %vm1453, %v1446, %v1450
    %v1455 = vand.u32 2147483647, %v1400
    %vm1456 = vcmp.eq.f32.partialorder %v1455, 8.507059e+37
    %v1457 = vand.u32 %v1400, 2147483648
    %v1458 = vor.u32 1.1754944e-38, %v1457
    %v1459 = vsel %vm1456, %v1458, %v1454
    %v1460 = vmul.f32 1.0, %v1459
    %v1461 = vld [vmem:[#allocation11] sm:$0xff]
    %v1462 = vld [vmem:[#allocation11 + $0x8] sm:$0xff]
    %v1463 = vld [vmem:[#allocation11 + $0x10] sm:$0xff]
    %v1464 = vld [vmem:[#allocation11 + $0x18] sm:$0xff]
    %v1465 = vld [vmem:[#allocation11 + $0x20] sm:$0xff]
    %v1466 = vld [vmem:[#allocation11 + $0x28] sm:$0xff]
    %v1467 = vld [vmem:[#allocation11 + $0x30] sm:$0xff]
    %v1468 = vld [vmem:[#allocation11 + $0x38] sm:$0xff]
    %v1469 = vld [vmem:[#allocation11 + $0x40] sm:$0xff]
    %v1470 = vld [vmem:[#allocation11 + $0x48] sm:$0xff]
    %v1471 = vld [vmem:[#allocation11 + $0x50] sm:$0xff]
    %v1472 = vld [vmem:[#allocation11 + $0x58] sm:$0xff]
    %v1473 = vld [vmem:[#allocation11 + $0x60] sm:$0xff]
    %v1474 = vld [vmem:[#allocation11 + $0x68] sm:$0xff]
    %v1475 = vld [vmem:[#allocation11 + $0x70] sm:$0xff]
    %v1476 = vld [vmem:[#allocation11 + $0x78] sm:$0xff]
    %v1477 = vld [vmem:[#allocation11 + $0x80] sm:$0xff]
    %v1478 = vld [vmem:[#allocation11 + $0x88] sm:$0xff]
    %v1479 = vld [vmem:[#allocation11 + $0x90] sm:$0xff]
    %v1480 = vld [vmem:[#allocation11 + $0x98] sm:$0xff]
    %v1481 = vld [vmem:[#allocation11 + $0xa0] sm:$0xff]
    %v1482 = vld [vmem:[#allocation11 + $0xa8] sm:$0xff]
    %v1483 = vld [vmem:[#allocation11 + $0xb0] sm:$0xff]
    %v1484 = vld [vmem:[#allocation11 + $0xb8] sm:$0xff]
    %v1485 = vld [vmem:[#allocation11 + $0xc0] sm:$0xff]
    %v1486 = vld [vmem:[#allocation11 + $0xc8] sm:$0xff]
    %v1487 = vld [vmem:[#allocation11 + $0xd0] sm:$0xff]
    %v1488 = vld [vmem:[#allocation11 + $0xd8] sm:$0xff]
    %v1489 = vld [vmem:[#allocation11 + $0xe0] sm:$0xff]
    %v1490 = vld [vmem:[#allocation11 + $0xe8] sm:$0xff]
    %v1491 = vld [vmem:[#allocation11 + $0xf0] sm:$0xff]
    %v1492 = vld [vmem:[#allocation11 + $0xf8] sm:$0xff]
    %v1493 = vld [vmem:[#allocation11 + $0x100] sm:$0xff]
    %v1494 = vld [vmem:[#allocation11 + $0x108] sm:$0xff]
    %v1495 = vld [vmem:[#allocation11 + $0x110] sm:$0xff]
    %v1496 = vld [vmem:[#allocation11 + $0x118] sm:$0xff]
    %v1497 = vld [vmem:[#allocation11 + $0x120] sm:$0xff]
    %v1498 = vld [vmem:[#allocation11 + $0x128] sm:$0xff]
    %v1499 = vld [vmem:[#allocation11 + $0x130] sm:$0xff]
    %v1500 = vld [vmem:[#allocation11 + $0x138] sm:$0xff]
    %v1501 = vld [vmem:[#allocation11 + $0x140] sm:$0xff]
    %v1502 = vld [vmem:[#allocation11 + $0x148] sm:$0xff]
    %v1503 = vld [vmem:[#allocation11 + $0x150] sm:$0xff]
    %v1504 = vld [vmem:[#allocation11 + $0x158] sm:$0xff]
    %v1505 = vld [vmem:[#allocation11 + $0x160] sm:$0xff]
    %v1506 = vld [vmem:[#allocation11 + $0x168] sm:$0xff]
    %v1507 = vld [vmem:[#allocation11 + $0x170] sm:$0xff]
    %v1508 = vld [vmem:[#allocation11 + $0x178] sm:$0xff]
    %v1509 = vld [vmem:[#allocation11 + $0x180] sm:$0xff]
    %v1510 = vld [vmem:[#allocation11 + $0x188] sm:$0xff]
    %v1511 = vld [vmem:[#allocation11 + $0x190] sm:$0xff]
    %v1512 = vld [vmem:[#allocation11 + $0x198] sm:$0xff]
    %v1513 = vld [vmem:[#allocation11 + $0x1a0] sm:$0xff]
    %v1514 = vld [vmem:[#allocation11 + $0x1a8] sm:$0xff]
    %v1515 = vld [vmem:[#allocation11 + $0x1b0] sm:$0xff]
    %v1516 = vld [vmem:[#allocation11 + $0x1b8] sm:$0xff]
    %v1517 = vld [vmem:[#allocation11 + $0x1c0] sm:$0xff]
    %v1518 = vld [vmem:[#allocation11 + $0x1c8] sm:$0xff]
    %v1519 = vld [vmem:[#allocation11 + $0x1d0] sm:$0xff]
    %v1520 = vld [vmem:[#allocation11 + $0x1d8] sm:$0xff]
    %v1521 = vld [vmem:[#allocation11 + $0x1e0] sm:$0xff]
    %v1522 = vld [vmem:[#allocation11 + $0x1e8] sm:$0xff]
    %v1523 = vld [vmem:[#allocation11 + $0x1f0] sm:$0xff]
    %v1524 = vld [vmem:[#allocation11 + $0x1f8] sm:$0xff]
    %v1525 = vld [vmem:[#allocation11 + $0x200] sm:$0xff]
    %v1526 = vld [vmem:[#allocation11 + $0x208] sm:$0xff]
    %v1527 = vld [vmem:[#allocation11 + $0x210] sm:$0xff]
    %v1528 = vld [vmem:[#allocation11 + $0x218] sm:$0xff]
    %v1529 = vld [vmem:[#allocation11 + $0x220] sm:$0xff]
    %v1530 = vld [vmem:[#allocation11 + $0x228] sm:$0xff]
    %v1531 = vld [vmem:[#allocation11 + $0x230] sm:$0xff]
    %v1532 = vld [vmem:[#allocation11 + $0x238] sm:$0xff]
    %v1533 = vld [vmem:[#allocation11 + $0x240] sm:$0xff]
    %v1534 = vld [vmem:[#allocation11 + $0x248] sm:$0xff]
    %v1535 = vld [vmem:[#allocation11 + $0x250] sm:$0xff]
    %v1536 = vld [vmem:[#allocation11 + $0x258] sm:$0xff]
    %v1537 = vld [vmem:[#allocation11 + $0x260] sm:$0xff]
    %v1538 = vld [vmem:[#allocation11 + $0x268] sm:$0xff]
    %v1539 = vld [vmem:[#allocation11 + $0x270] sm:$0xff]
    %v1540 = vld [vmem:[#allocation11 + $0x278] sm:$0xff]
    %v1541 = vld [vmem:[#allocation11 + $0x280] sm:$0xff]
    %v1542 = vld [vmem:[#allocation11 + $0x288] sm:$0xff]
    %v1543 = vld [vmem:[#allocation11 + $0x290] sm:$0xff]
    %v1544 = vld [vmem:[#allocation11 + $0x298] sm:$0xff]
    %v1545 = vld [vmem:[#allocation11 + $0x2a0] sm:$0xff]
    %v1546 = vld [vmem:[#allocation11 + $0x2a8] sm:$0xff]
    %v1547 = vld [vmem:[#allocation11 + $0x2b0] sm:$0xff]
    %v1548 = vld [vmem:[#allocation11 + $0x2b8] sm:$0xff]
    %v1549 = vld [vmem:[#allocation11 + $0x2c0] sm:$0xff]
    %v1550 = vld [vmem:[#allocation11 + $0x2c8] sm:$0xff]
    %v1551 = vld [vmem:[#allocation11 + $0x2d0] sm:$0xff]
    %v1552 = vld [vmem:[#allocation11 + $0x2d8] sm:$0xff]
    %v1553 = vld [vmem:[#allocation11 + $0x2e0] sm:$0xff]
    %v1554 = vld [vmem:[#allocation11 + $0x2e8] sm:$0xff]
    %v1555 = vld [vmem:[#allocation11 + $0x2f0] sm:$0xff]
    %v1556 = vld [vmem:[#allocation11 + $0x2f8] sm:$0xff]
    %v1557 = vld [vmem:[#allocation11 + $0x300] sm:$0xff]
    %v1558 = vld [vmem:[#allocation11 + $0x308] sm:$0xff]
    %v1559 = vld [vmem:[#allocation11 + $0x310] sm:$0xff]
    %v1560 = vld [vmem:[#allocation11 + $0x318] sm:$0xff]
    %v1561 = vld [vmem:[#allocation11 + $0x320] sm:$0xff]
    %v1562 = vld [vmem:[#allocation11 + $0x328] sm:$0xff]
    %v1563 = vld [vmem:[#allocation11 + $0x330] sm:$0xff]
    %v1564 = vld [vmem:[#allocation11 + $0x338] sm:$0xff]
    %v1565 = vld [vmem:[#allocation11 + $0x340] sm:$0xff]
    %v1566 = vld [vmem:[#allocation11 + $0x348] sm:$0xff]
    %v1567 = vld [vmem:[#allocation11 + $0x350] sm:$0xff]
    %v1568 = vld [vmem:[#allocation11 + $0x358] sm:$0xff]
    %v1569 = vld [vmem:[#allocation11 + $0x360] sm:$0xff]
    %v1570 = vld [vmem:[#allocation11 + $0x368] sm:$0xff]
    %v1571 = vld [vmem:[#allocation11 + $0x370] sm:$0xff]
    %v1572 = vld [vmem:[#allocation11 + $0x378] sm:$0xff]
    %v1573 = vld [vmem:[#allocation11 + $0x380] sm:$0xff]
    %v1574 = vld [vmem:[#allocation11 + $0x388] sm:$0xff]
    %v1575 = vld [vmem:[#allocation11 + $0x390] sm:$0xff]
    %v1576 = vld [vmem:[#allocation11 + $0x398] sm:$0xff]
    %v1577 = vld [vmem:[#allocation11 + $0x3a0] sm:$0xff]
    %v1578 = vld [vmem:[#allocation11 + $0x3a8] sm:$0xff]
    %v1579 = vld [vmem:[#allocation11 + $0x3b0] sm:$0xff]
    %v1580 = vld [vmem:[#allocation11 + $0x3b8] sm:$0xff]
    %v1581 = vld [vmem:[#allocation11 + $0x3c0] sm:$0xff]
    %v1582 = vld [vmem:[#allocation11 + $0x3c8] sm:$0xff]
    %v1583 = vld [vmem:[#allocation11 + $0x3d0] sm:$0xff]
    %v1584 = vld [vmem:[#allocation11 + $0x3d8] sm:$0xff]
    %v1585 = vld [vmem:[#allocation11 + $0x3e0] sm:$0xff]
    %v1586 = vld [vmem:[#allocation11 + $0x3e8] sm:$0xff]
    %v1587 = vld [vmem:[#allocation11 + $0x3f0] sm:$0xff]
    %v1588 = vld [vmem:[#allocation11 + $0x3f8] sm:$0xff]
    %v1589 = vld [vmem:[#allocation11 + $0x400] sm:$0xff]
    %v1590 = vld [vmem:[#allocation11 + $0x408] sm:$0xff]
    %v1591 = vld [vmem:[#allocation11 + $0x410] sm:$0xff]
    %v1592 = vld [vmem:[#allocation11 + $0x418] sm:$0xff]
    %v1593 = vld [vmem:[#allocation11 + $0x420] sm:$0xff]
    %v1594 = vld [vmem:[#allocation11 + $0x428] sm:$0xff]
    %v1595 = vld [vmem:[#allocation11 + $0x430] sm:$0xff]
    %v1596 = vld [vmem:[#allocation11 + $0x438] sm:$0xff]
    %v1597 = vld [vmem:[#allocation11 + $0x440] sm:$0xff]
    %v1598 = vld [vmem:[#allocation11 + $0x448] sm:$0xff]
    %v1599 = vld [vmem:[#allocation11 + $0x450] sm:$0xff]
    %v1600 = vld [vmem:[#allocation11 + $0x458] sm:$0xff]
    %v1601 = vld [vmem:[#allocation11 + $0x460] sm:$0xff]
    %v1602 = vld [vmem:[#allocation11 + $0x468] sm:$0xff]
    %v1603 = vld [vmem:[#allocation11 + $0x470] sm:$0xff]
    %v1604 = vld [vmem:[#allocation11 + $0x478] sm:$0xff]
    %v1605 = vld [vmem:[#allocation11 + $0x480] sm:$0xff]
    %v1606 = vld [vmem:[#allocation11 + $0x488] sm:$0xff]
    %v1607 = vld [vmem:[#allocation11 + $0x490] sm:$0xff]
    %v1608 = vld [vmem:[#allocation11 + $0x498] sm:$0xff]
    %v1609 = vld [vmem:[#allocation11 + $0x4a0] sm:$0xff]
    %v1610 = vld [vmem:[#allocation11 + $0x4a8] sm:$0xff]
    %v1611 = vld [vmem:[#allocation11 + $0x4b0] sm:$0xff]
    %v1612 = vld [vmem:[#allocation11 + $0x4b8] sm:$0xff]
    %v1613 = vld [vmem:[#allocation11 + $0x4c0] sm:$0xff]
    %v1614 = vld [vmem:[#allocation11 + $0x4c8] sm:$0xff]
    %v1615 = vld [vmem:[#allocation11 + $0x4d0] sm:$0xff]
    %v1616 = vld [vmem:[#allocation11 + $0x4d8] sm:$0xff]
    %v1617 = vld [vmem:[#allocation11 + $0x4e0] sm:$0xff]
    %v1618 = vld [vmem:[#allocation11 + $0x4e8] sm:$0xff]
    %v1619 = vld [vmem:[#allocation11 + $0x4f0] sm:$0xff]
    %v1620 = vld [vmem:[#allocation11 + $0x4f8] sm:$0xff]
    %v1621 = vld [vmem:[#allocation11 + $0x500] sm:$0xff]
    %v1622 = vld [vmem:[#allocation11 + $0x508] sm:$0xff]
    %v1623 = vld [vmem:[#allocation11 + $0x510] sm:$0xff]
    %v1624 = vld [vmem:[#allocation11 + $0x518] sm:$0xff]
    %v1625 = vld [vmem:[#allocation11 + $0x520] sm:$0xff]
    %v1626 = vld [vmem:[#allocation11 + $0x528] sm:$0xff]
    %v1627 = vld [vmem:[#allocation11 + $0x530] sm:$0xff]
    %v1628 = vld [vmem:[#allocation11 + $0x538] sm:$0xff]
    %v1629 = vld [vmem:[#allocation11 + $0x540] sm:$0xff]
    %v1630 = vld [vmem:[#allocation11 + $0x548] sm:$0xff]
    %v1631 = vld [vmem:[#allocation11 + $0x550] sm:$0xff]
    %v1632 = vld [vmem:[#allocation11 + $0x558] sm:$0xff]
    %v1633 = vld [vmem:[#allocation11 + $0x560] sm:$0xff]
    %v1634 = vld [vmem:[#allocation11 + $0x568] sm:$0xff]
    %v1635 = vld [vmem:[#allocation11 + $0x570] sm:$0xff]
    %v1636 = vld [vmem:[#allocation11 + $0x578] sm:$0xff]
    %v1637 = vld [vmem:[#allocation11 + $0x580] sm:$0xff]
    %v1638 = vld [vmem:[#allocation11 + $0x588] sm:$0xff]
    %v1639 = vld [vmem:[#allocation11 + $0x590] sm:$0xff]
    %v1640 = vld [vmem:[#allocation11 + $0x598] sm:$0xff]
    %v1641 = vld [vmem:[#allocation11 + $0x5a0] sm:$0xff]
    %v1642 = vld [vmem:[#allocation11 + $0x5a8] sm:$0xff]
    %v1643 = vld [vmem:[#allocation11 + $0x5b0] sm:$0xff]
    %v1644 = vld [vmem:[#allocation11 + $0x5b8] sm:$0xff]
    %v1645 = vld [vmem:[#allocation11 + $0x5c0] sm:$0xff]
    %v1646 = vld [vmem:[#allocation11 + $0x5c8] sm:$0xff]
    %v1647 = vld [vmem:[#allocation11 + $0x5d0] sm:$0xff]
    %v1648 = vld [vmem:[#allocation11 + $0x5d8] sm:$0xff]
    %v1649 = vld [vmem:[#allocation11 + $0x5e0] sm:$0xff]
    %v1650 = vld [vmem:[#allocation11 + $0x5e8] sm:$0xff]
    %v1651 = vld [vmem:[#allocation11 + $0x5f0] sm:$0xff]
    %v1652 = vld [vmem:[#allocation11 + $0x5f8] sm:$0xff]
    %v1653 = vld [vmem:[#allocation11 + $0x600] sm:$0xff]
    %v1654 = vld [vmem:[#allocation11 + $0x608] sm:$0xff]
    %v1655 = vld [vmem:[#allocation11 + $0x610] sm:$0xff]
    %v1656 = vld [vmem:[#allocation11 + $0x618] sm:$0xff]
    %v1657 = vld [vmem:[#allocation11 + $0x620] sm:$0xff]
    %v1658 = vld [vmem:[#allocation11 + $0x628] sm:$0xff]
    %v1659 = vld [vmem:[#allocation11 + $0x630] sm:$0xff]
    %v1660 = vld [vmem:[#allocation11 + $0x638] sm:$0xff]
    %v1661 = vld [vmem:[#allocation11 + $0x640] sm:$0xff]
    %v1662 = vld [vmem:[#allocation11 + $0x648] sm:$0xff]
    %v1663 = vld [vmem:[#allocation11 + $0x650] sm:$0xff]
    %v1664 = vld [vmem:[#allocation11 + $0x658] sm:$0xff]
    %v1665 = vld [vmem:[#allocation11 + $0x660] sm:$0xff]
    %v1666 = vld [vmem:[#allocation11 + $0x668] sm:$0xff]
    %v1667 = vld [vmem:[#allocation11 + $0x670] sm:$0xff]
    %v1668 = vld [vmem:[#allocation11 + $0x678] sm:$0xff]
    %v1669 = vld [vmem:[#allocation11 + $0x680] sm:$0xff]
    %v1670 = vld [vmem:[#allocation11 + $0x688] sm:$0xff]
    %v1671 = vld [vmem:[#allocation11 + $0x690] sm:$0xff]
    %v1672 = vld [vmem:[#allocation11 + $0x698] sm:$0xff]
    %v1673 = vld [vmem:[#allocation11 + $0x6a0] sm:$0xff]
    %v1674 = vld [vmem:[#allocation11 + $0x6a8] sm:$0xff]
    %v1675 = vld [vmem:[#allocation11 + $0x6b0] sm:$0xff]
    %v1676 = vld [vmem:[#allocation11 + $0x6b8] sm:$0xff]
    %v1677 = vld [vmem:[#allocation11 + $0x6c0] sm:$0xff]
    %v1678 = vld [vmem:[#allocation11 + $0x6c8] sm:$0xff]
    %v1679 = vld [vmem:[#allocation11 + $0x6d0] sm:$0xff]
    %v1680 = vld [vmem:[#allocation11 + $0x6d8] sm:$0xff]
    %v1681 = vld [vmem:[#allocation11 + $0x6e0] sm:$0xff]
    %v1682 = vld [vmem:[#allocation11 + $0x6e8] sm:$0xff]
    %v1683 = vld [vmem:[#allocation11 + $0x6f0] sm:$0xff]
    %v1684 = vld [vmem:[#allocation11 + $0x6f8] sm:$0xff]
    %v1685 = vld [vmem:[#allocation11 + $0x700] sm:$0xff]
    %v1686 = vld [vmem:[#allocation11 + $0x708] sm:$0xff]
    %v1687 = vld [vmem:[#allocation11 + $0x710] sm:$0xff]
    %v1688 = vld [vmem:[#allocation11 + $0x718] sm:$0xff]
    %v1689 = vld [vmem:[#allocation11 + $0x720] sm:$0xff]
    %v1690 = vld [vmem:[#allocation11 + $0x728] sm:$0xff]
    %v1691 = vld [vmem:[#allocation11 + $0x730] sm:$0xff]
    %v1692 = vld [vmem:[#allocation11 + $0x738] sm:$0xff]
    %v1693 = vld [vmem:[#allocation11 + $0x740] sm:$0xff]
    %v1694 = vld [vmem:[#allocation11 + $0x748] sm:$0xff]
    %v1695 = vld [vmem:[#allocation11 + $0x750] sm:$0xff]
    %v1696 = vld [vmem:[#allocation11 + $0x758] sm:$0xff]
    %v1697 = vld [vmem:[#allocation11 + $0x760] sm:$0xff]
    %v1698 = vld [vmem:[#allocation11 + $0x768] sm:$0xff]
    %v1699 = vld [vmem:[#allocation11 + $0x770] sm:$0xff]
    %v1700 = vld [vmem:[#allocation11 + $0x778] sm:$0xff]
    %v1701 = vld [vmem:[#allocation11 + $0x780] sm:$0xff]
    %v1702 = vld [vmem:[#allocation11 + $0x788] sm:$0xff]
    %v1703 = vld [vmem:[#allocation11 + $0x790] sm:$0xff]
    %v1704 = vld [vmem:[#allocation11 + $0x798] sm:$0xff]
    %v1705 = vld [vmem:[#allocation11 + $0x7a0] sm:$0xff]
    %v1706 = vld [vmem:[#allocation11 + $0x7a8] sm:$0xff]
    %v1707 = vld [vmem:[#allocation11 + $0x7b0] sm:$0xff]
    %v1708 = vld [vmem:[#allocation11 + $0x7b8] sm:$0xff]
    %v1709 = vld [vmem:[#allocation11 + $0x7c0] sm:$0xff]
    %v1710 = vld [vmem:[#allocation11 + $0x7c8] sm:$0xff]
    %v1711 = vld [vmem:[#allocation11 + $0x7d0] sm:$0xff]
    %v1712 = vld [vmem:[#allocation11 + $0x7d8] sm:$0xff]
    %v1713 = vld [vmem:[#allocation11 + $0x7e0] sm:$0xff]
    %v1714 = vld [vmem:[#allocation11 + $0x7e8] sm:$0xff]
    %v1715 = vld [vmem:[#allocation11 + $0x7f0] sm:$0xff]
    %v1716 = vld [vmem:[#allocation11 + $0x7f8] sm:$0xff]
    %v1717 = vld [vmem:[%s6] sm:$0xf]
    %v1719 = vperm.slane %v1717, 0
    %v1720 = vperm.slane %v1717, 1
    %v1721 = vperm.slane %v1717, 2
    %v1722 = vperm.slane %v1717, 3
    %1727 = vmatpush.msra.mxu0 %v1521
    %1728 = vmatpush.msra.mxu0 %v1517
    %1729 = vmatpush.msra.mxu0 %v1513
    %1730 = vmatpush.msra.mxu0 %v1509
    %1731 = vmatpush.msra.mxu0 %v1505
    %1732 = vmatpush.msra.mxu0 %v1501
    %1733 = vmatpush.msra.mxu0 %v1497
    %1734 = vmatpush.msra.mxu0 %v1493
    %1735 = vmatpush.msra.mxu0 %v1489
    %1736 = vmatpush.msra.mxu0 %v1485
    %1737 = vmatpush.msra.mxu0 %v1481
    %1738 = vmatpush.msra.mxu0 %v1477
    %1739 = vmatpush.msra.mxu0 %v1473
    %1740 = vmatpush.msra.mxu0 %v1469
    %1741 = vmatpush.msra.mxu0 %v1465
    %1742 = vmatpush.msra.mxu0 %v1461
    %1743 = vmatmul.f32.gmra.mxu0 %v1415
    %v1744 = vpop.f32.mrf.mxu0
    %v1745 = vadd.f32 %v1719, %v1744
    %1746 = vdwg.mxu0
    %1747 = vmatpush.msra.mxu0 %v1585
    %1748 = vmatpush.msra.mxu0 %v1581
    %1749 = vmatpush.msra.mxu0 %v1577
    %1750 = vmatpush.msra.mxu0 %v1573
    %1751 = vmatpush.msra.mxu0 %v1569
    %1752 = vmatpush.msra.mxu0 %v1565
    %1753 = vmatpush.msra.mxu0 %v1561
    %1754 = vmatpush.msra.mxu0 %v1557
    %1755 = vmatpush.msra.mxu0 %v1553
    %1756 = vmatpush.msra.mxu0 %v1549
    %1757 = vmatpush.msra.mxu0 %v1545
    %1758 = vmatpush.msra.mxu0 %v1541
    %1759 = vmatpush.msra.mxu0 %v1537
    %1760 = vmatpush.msra.mxu0 %v1533
    %1761 = vmatpush.msra.mxu0 %v1529
    %1762 = vmatpush.msra.mxu0 %v1525
    %1763 = vmatmul.f32.gmra.mxu0 %v1430
    %v1764 = vpop.f32.mrf.mxu0
    %v1765 = vadd.f32 %v1745, %v1764
    %1766 = vdwg.mxu0
    %1767 = vmatpush.msra.mxu0 %v1649
    %1768 = vmatpush.msra.mxu0 %v1645
    %1769 = vmatpush.msra.mxu0 %v1641
    %1770 = vmatpush.msra.mxu0 %v1637
    %1771 = vmatpush.msra.mxu0 %v1633
    %1772 = vmatpush.msra.mxu0 %v1629
    %1773 = vmatpush.msra.mxu0 %v1625
    %1774 = vmatpush.msra.mxu0 %v1621
    %1775 = vmatpush.msra.mxu0 %v1617
    %1776 = vmatpush.msra.mxu0 %v1613
    %1777 = vmatpush.msra.mxu0 %v1609
    %1778 = vmatpush.msra.mxu0 %v1605
    %1779 = vmatpush.msra.mxu0 %v1601
    %1780 = vmatpush.msra.mxu0 %v1597
    %1781 = vmatpush.msra.mxu0 %v1593
    %1782 = vmatpush.msra.mxu0 %v1589
    %1783 = vmatmul.f32.gmra.mxu0 %v1445
    %v1784 = vpop.f32.mrf.mxu0
    %v1785 = vadd.f32 %v1765, %v1784
    %1786 = vdwg.mxu0
    %1787 = vmatpush.msra.mxu0 %v1713
    %1788 = vmatpush.msra.mxu0 %v1709
    %1789 = vmatpush.msra.mxu0 %v1705
    %1790 = vmatpush.msra.mxu0 %v1701
    %1791 = vmatpush.msra.mxu0 %v1697
    %1792 = vmatpush.msra.mxu0 %v1693
    %1793 = vmatpush.msra.mxu0 %v1689
    %1794 = vmatpush.msra.mxu0 %v1685
    %1795 = vmatpush.msra.mxu0 %v1681
    %1796 = vmatpush.msra.mxu0 %v1677
    %1797 = vmatpush.msra.mxu0 %v1673
    %1798 = vmatpush.msra.mxu0 %v1669
    %1799 = vmatpush.msra.mxu0 %v1665
    %1800 = vmatpush.msra.mxu0 %v1661
    %1801 = vmatpush.msra.mxu0 %v1657
    %1802 = vmatpush.msra.mxu0 %v1653
    %1803 = vmatmul.f32.gmra.mxu0 %v1460
    %v1804 = vpop.f32.mrf.mxu0
    %v1805 = vadd.f32 %v1785, %v1804
    %1806 = vdwg.mxu0
    %1807 = vmatpush.msra.mxu0 %v1522
    %1808 = vmatpush.msra.mxu0 %v1518
    %1809 = vmatpush.msra.mxu0 %v1514
    %1810 = vmatpush.msra.mxu0 %v1510
    %1811 = vmatpush.msra.mxu0 %v1506
    %1812 = vmatpush.msra.mxu0 %v1502
    %1813 = vmatpush.msra.mxu0 %v1498
    %1814 = vmatpush.msra.mxu0 %v1494
    %1815 = vmatpush.msra.mxu0 %v1490
    %1816 = vmatpush.msra.mxu0 %v1486
    %1817 = vmatpush.msra.mxu0 %v1482
    %1818 = vmatpush.msra.mxu0 %v1478
    %1819 = vmatpush.msra.mxu0 %v1474
    %1820 = vmatpush.msra.mxu0 %v1470
    %1821 = vmatpush.msra.mxu0 %v1466
    %1822 = vmatpush.msra.mxu0 %v1462
    %1823 = vmatmul.f32.gmra.mxu0 %v1415
    %v1824 = vpop.f32.mrf.mxu0
    %v1825 = vadd.f32 %v1720, %v1824
    %1826 = vdwg.mxu0
    %1827 = vmatpush.msra.mxu0 %v1586
    %1828 = vmatpush.msra.mxu0 %v1582
    %1829 = vmatpush.msra.mxu0 %v1578
    %1830 = vmatpush.msra.mxu0 %v1574
    %1831 = vmatpush.msra.mxu0 %v1570
    %1832 = vmatpush.msra.mxu0 %v1566
    %1833 = vmatpush.msra.mxu0 %v1562
    %1834 = vmatpush.msra.mxu0 %v1558
    %1835 = vmatpush.msra.mxu0 %v1554
    %1836 = vmatpush.msra.mxu0 %v1550
    %1837 = vmatpush.msra.mxu0 %v1546
    %1838 = vmatpush.msra.mxu0 %v1542
    %1839 = vmatpush.msra.mxu0 %v1538
    %1840 = vmatpush.msra.mxu0 %v1534
    %1841 = vmatpush.msra.mxu0 %v1530
    %1842 = vmatpush.msra.mxu0 %v1526
    %1843 = vmatmul.f32.gmra.mxu0 %v1430
    %v1844 = vpop.f32.mrf.mxu0
    %v1845 = vadd.f32 %v1825, %v1844
    %1846 = vdwg.mxu0
    %1847 = vmatpush.msra.mxu0 %v1650
    %1848 = vmatpush.msra.mxu0 %v1646
    %1849 = vmatpush.msra.mxu0 %v1642
    %1850 = vmatpush.msra.mxu0 %v1638
    %1851 = vmatpush.msra.mxu0 %v1634
    %1852 = vmatpush.msra.mxu0 %v1630
    %1853 = vmatpush.msra.mxu0 %v1626
    %1854 = vmatpush.msra.mxu0 %v1622
    %1855 = vmatpush.msra.mxu0 %v1618
    %1856 = vmatpush.msra.mxu0 %v1614
    %1857 = vmatpush.msra.mxu0 %v1610
    %1858 = vmatpush.msra.mxu0 %v1606
    %1859 = vmatpush.msra.mxu0 %v1602
    %1860 = vmatpush.msra.mxu0 %v1598
    %1861 = vmatpush.msra.mxu0 %v1594
    %1862 = vmatpush.msra.mxu0 %v1590
    %1863 = vmatmul.f32.gmra.mxu0 %v1445
    %v1864 = vpop.f32.mrf.mxu0
    %v1865 = vadd.f32 %v1845, %v1864
    %1866 = vdwg.mxu0
    %1867 = vmatpush.msra.mxu0 %v1714
    %1868 = vmatpush.msra.mxu0 %v1710
    %1869 = vmatpush.msra.mxu0 %v1706
    %1870 = vmatpush.msra.mxu0 %v1702
    %1871 = vmatpush.msra.mxu0 %v1698
    %1872 = vmatpush.msra.mxu0 %v1694
    %1873 = vmatpush.msra.mxu0 %v1690
    %1874 = vmatpush.msra.mxu0 %v1686
    %1875 = vmatpush.msra.mxu0 %v1682
    %1876 = vmatpush.msra.mxu0 %v1678
    %1877 = vmatpush.msra.mxu0 %v1674
    %1878 = vmatpush.msra.mxu0 %v1670
    %1879 = vmatpush.msra.mxu0 %v1666
    %1880 = vmatpush.msra.mxu0 %v1662
    %1881 = vmatpush.msra.mxu0 %v1658
    %1882 = vmatpush.msra.mxu0 %v1654
    %1883 = vmatmul.f32.gmra.mxu0 %v1460
    %v1884 = vpop.f32.mrf.mxu0
    %v1885 = vadd.f32 %v1865, %v1884
    %1886 = vdwg.mxu0
    %1887 = vmatpush.msra.mxu0 %v1523
    %1888 = vmatpush.msra.mxu0 %v1519
    %1889 = vmatpush.msra.mxu0 %v1515
    %1890 = vmatpush.msra.mxu0 %v1511
    %1891 = vmatpush.msra.mxu0 %v1507
    %1892 = vmatpush.msra.mxu0 %v1503
    %1893 = vmatpush.msra.mxu0 %v1499
    %1894 = vmatpush.msra.mxu0 %v1495
    %1895 = vmatpush.msra.mxu0 %v1491
    %1896 = vmatpush.msra.mxu0 %v1487
    %1897 = vmatpush.msra.mxu0 %v1483
    %1898 = vmatpush.msra.mxu0 %v1479
    %1899 = vmatpush.msra.mxu0 %v1475
    %1900 = vmatpush.msra.mxu0 %v1471
    %1901 = vmatpush.msra.mxu0 %v1467
    %1902 = vmatpush.msra.mxu0 %v1463
    %1903 = vmatmul.f32.gmra.mxu0 %v1415
    %v1904 = vpop.f32.mrf.mxu0
    %v1905 = vadd.f32 %v1721, %v1904
    %1906 = vdwg.mxu0
    %1907 = vmatpush.msra.mxu0 %v1587
    %1908 = vmatpush.msra.mxu0 %v1583
    %1909 = vmatpush.msra.mxu0 %v1579
    %1910 = vmatpush.msra.mxu0 %v1575
    %1911 = vmatpush.msra.mxu0 %v1571
    %1912 = vmatpush.msra.mxu0 %v1567
    %1913 = vmatpush.msra.mxu0 %v1563
    %1914 = vmatpush.msra.mxu0 %v1559
    %1915 = vmatpush.msra.mxu0 %v1555
    %1916 = vmatpush.msra.mxu0 %v1551
    %1917 = vmatpush.msra.mxu0 %v1547
    %1918 = vmatpush.msra.mxu0 %v1543
    %1919 = vmatpush.msra.mxu0 %v1539
    %1920 = vmatpush.msra.mxu0 %v1535
    %1921 = vmatpush.msra.mxu0 %v1531
    %1922 = vmatpush.msra.mxu0 %v1527
    %1923 = vmatmul.f32.gmra.mxu0 %v1430
    %v1924 = vpop.f32.mrf.mxu0
    %v1925 = vadd.f32 %v1905, %v1924
    %1926 = vdwg.mxu0
    %1927 = vmatpush.msra.mxu0 %v1651
    %1928 = vmatpush.msra.mxu0 %v1647
    %1929 = vmatpush.msra.mxu0 %v1643
    %1930 = vmatpush.msra.mxu0 %v1639
    %1931 = vmatpush.msra.mxu0 %v1635
    %1932 = vmatpush.msra.mxu0 %v1631
    %1933 = vmatpush.msra.mxu0 %v1627
    %1934 = vmatpush.msra.mxu0 %v1623
    %1935 = vmatpush.msra.mxu0 %v1619
    %1936 = vmatpush.msra.mxu0 %v1615
    %1937 = vmatpush.msra.mxu0 %v1611
    %1938 = vmatpush.msra.mxu0 %v1607
    %1939 = vmatpush.msra.mxu0 %v1603
    %1940 = vmatpush.msra.mxu0 %v1599
    %1941 = vmatpush.msra.mxu0 %v1595
    %1942 = vmatpush.msra.mxu0 %v1591
    %1943 = vmatmul.f32.gmra.mxu0 %v1445
    %v1944 = vpop.f32.mrf.mxu0
    %v1945 = vadd.f32 %v1925, %v1944
    %1946 = vdwg.mxu0
    %1947 = vmatpush.msra.mxu0 %v1715
    %1948 = vmatpush.msra.mxu0 %v1711
    %1949 = vmatpush.msra.mxu0 %v1707
    %1950 = vmatpush.msra.mxu0 %v1703
    %1951 = vmatpush.msra.mxu0 %v1699
    %1952 = vmatpush.msra.mxu0 %v1695
    %1953 = vmatpush.msra.mxu0 %v1691
    %1954 = vmatpush.msra.mxu0 %v1687
    %1955 = vmatpush.msra.mxu0 %v1683
    %1956 = vmatpush.msra.mxu0 %v1679
    %1957 = vmatpush.msra.mxu0 %v1675
    %1958 = vmatpush.msra.mxu0 %v1671
    %1959 = vmatpush.msra.mxu0 %v1667
    %1960 = vmatpush.msra.mxu0 %v1663
    %1961 = vmatpush.msra.mxu0 %v1659
    %1962 = vmatpush.msra.mxu0 %v1655
    %1963 = vmatmul.f32.gmra.mxu0 %v1460
    %v1964 = vpop.f32.mrf.mxu0
    %v1965 = vadd.f32 %v1945, %v1964
    %1966 = vdwg.mxu0
    %1967 = vmatpush.msra.mxu0 %v1524
    %1968 = vmatpush.msra.mxu0 %v1520
    %1969 = vmatpush.msra.mxu0 %v1516
    %1970 = vmatpush.msra.mxu0 %v1512
    %1971 = vmatpush.msra.mxu0 %v1508
    %1972 = vmatpush.msra.mxu0 %v1504
    %1973 = vmatpush.msra.mxu0 %v1500
    %1974 = vmatpush.msra.mxu0 %v1496
    %1975 = vmatpush.msra.mxu0 %v1492
    %1976 = vmatpush.msra.mxu0 %v1488
    %1977 = vmatpush.msra.mxu0 %v1484
    %1978 = vmatpush.msra.mxu0 %v1480
    %1979 = vmatpush.msra.mxu0 %v1476
    %1980 = vmatpush.msra.mxu0 %v1472
    %1981 = vmatpush.msra.mxu0 %v1468
    %1982 = vmatpush.msra.mxu0 %v1464
    %1983 = vmatmul.f32.gmra.mxu0 %v1415
    %v1984 = vpop.f32.mrf.mxu0
    %v1985 = vadd.f32 %v1722, %v1984
    %1986 = vdwg.mxu0
    %1987 = vmatpush.msra.mxu0 %v1588
    %1988 = vmatpush.msra.mxu0 %v1584
    %1989 = vmatpush.msra.mxu0 %v1580
    %1990 = vmatpush.msra.mxu0 %v1576
    %1991 = vmatpush.msra.mxu0 %v1572
    %1992 = vmatpush.msra.mxu0 %v1568
    %1993 = vmatpush.msra.mxu0 %v1564
    %1994 = vmatpush.msra.mxu0 %v1560
    %1995 = vmatpush.msra.mxu0 %v1556
    %1996 = vmatpush.msra.mxu0 %v1552
    %1997 = vmatpush.msra.mxu0 %v1548
    %1998 = vmatpush.msra.mxu0 %v1544
    %1999 = vmatpush.msra.mxu0 %v1540
    %2000 = vmatpush.msra.mxu0 %v1536
    %2001 = vmatpush.msra.mxu0 %v1532
    %2002 = vmatpush.msra.mxu0 %v1528
    %2003 = vmatmul.f32.gmra.mxu0 %v1430
    %v2004 = vpop.f32.mrf.mxu0
    %v2005 = vadd.f32 %v1985, %v2004
    %2006 = vdwg.mxu0
    %2007 = vmatpush.msra.mxu0 %v1652
    %2008 = vmatpush.msra.mxu0 %v1648
    %2009 = vmatpush.msra.mxu0 %v1644
    %2010 = vmatpush.msra.mxu0 %v1640
    %2011 = vmatpush.msra.mxu0 %v1636
    %2012 = vmatpush.msra.mxu0 %v1632
    %2013 = vmatpush.msra.mxu0 %v1628
    %2014 = vmatpush.msra.mxu0 %v1624
    %2015 = vmatpush.msra.mxu0 %v1620
    %2016 = vmatpush.msra.mxu0 %v1616
    %2017 = vmatpush.msra.mxu0 %v1612
    %2018 = vmatpush.msra.mxu0 %v1608
    %2019 = vmatpush.msra.mxu0 %v1604
    %2020 = vmatpush.msra.mxu0 %v1600
    %2021 = vmatpush.msra.mxu0 %v1596
    %2022 = vmatpush.msra.mxu0 %v1592
    %2023 = vmatmul.f32.gmra.mxu0 %v1445
    %v2024 = vpop.f32.mrf.mxu0
    %v2025 = vadd.f32 %v2005, %v2024
    %2026 = vdwg.mxu0
    %2027 = vmatpush.msra.mxu0 %v1716
    %2028 = vmatpush.msra.mxu0 %v1712
    %2029 = vmatpush.msra.mxu0 %v1708
    %2030 = vmatpush.msra.mxu0 %v1704
    %2031 = vmatpush.msra.mxu0 %v1700
    %2032 = vmatpush.msra.mxu0 %v1696
    %2033 = vmatpush.msra.mxu0 %v1692
    %2034 = vmatpush.msra.mxu0 %v1688
    %2035 = vmatpush.msra.mxu0 %v1684
    %2036 = vmatpush.msra.mxu0 %v1680
    %2037 = vmatpush.msra.mxu0 %v1676
    %2038 = vmatpush.msra.mxu0 %v1672
    %2039 = vmatpush.msra.mxu0 %v1668
    %2040 = vmatpush.msra.mxu0 %v1664
    %2041 = vmatpush.msra.mxu0 %v1660
    %2042 = vmatpush.msra.mxu0 %v1656
    %2043 = vmatmul.f32.gmra.mxu0 %v1460
    %v2044 = vpop.f32.mrf.mxu0
    %v2045 = vadd.f32 %v2025, %v2044
    %2046 = vdwg.mxu0
    %v2047 = vxor.u32 %v1805, 2147483648
    %v2048 = vxor.u32 %v1885, 2147483648
    %v2049 = vxor.u32 %v1965, 2147483648
    %v2050 = vxor.u32 %v2045, 2147483648
    %v2051 = vmul.f32 %v2047, 1.442695
    %v2052 = vpow.pop %v2051
    %v2053 = vmul.f32 %v2048, 1.442695
    %v2054 = vpow.pop %v2053
    %v2055 = vmul.f32 %v2049, 1.442695
    %v2056 = vpow.pop %v2055
    %v2057 = vmul.f32 %v2050, 1.442695
    %v2058 = vpow.pop %v2057
    %v2059 = vadd.f32 %v2052, 1.0
    %v2060 = vadd.f32 %v2054, 1.0
    %v2061 = vadd.f32 %v2056, 1.0
    %v2062 = vadd.f32 %v2058, 1.0
    %v2063 = vrcp.pop %v2059
    %v2064 = vmul.f32 %v2059, %v2063
    %v2065 = vsub.f32 1.0, %v2064
    %v2066 = vmul.f32 %v2063, %v2065
    %v2067 = vadd.f32 %v2063, %v2066
    %vm2068 = vweird.f32 %v2059
    %vm2069 = vweird.f32 %v2063
    %vm2070 = vmor %vm2068, %vm2069
    %v2071 = vsel %vm2070, %v2063, %v2067
    %v2072 = vand.u32 2147483647, %v2059
    %vm2073 = vcmp.eq.f32.partialorder %v2072, 8.507059e+37
    %v2074 = vand.u32 %v2059, 2147483648
    %v2075 = vor.u32 1.1754944e-38, %v2074
    %v2076 = vsel %vm2073, %v2075, %v2071
    %v2077 = vmul.f32 1.0, %v2076
    %v2078 = vrcp.pop %v2060
    %v2079 = vmul.f32 %v2060, %v2078
    %v2080 = vsub.f32 1.0, %v2079
    %v2081 = vmul.f32 %v2078, %v2080
    %v2082 = vadd.f32 %v2078, %v2081
    %vm2083 = vweird.f32 %v2060
    %vm2084 = vweird.f32 %v2078
    %vm2085 = vmor %vm2083, %vm2084
    %v2086 = vsel %vm2085, %v2078, %v2082
    %v2087 = vand.u32 2147483647, %v2060
    %vm2088 = vcmp.eq.f32.partialorder %v2087, 8.507059e+37
    %v2089 = vand.u32 %v2060, 2147483648
    %v2090 = vor.u32 1.1754944e-38, %v2089
    %v2091 = vsel %vm2088, %v2090, %v2086
    %v2092 = vmul.f32 1.0, %v2091
    %v2093 = vrcp.pop %v2061
    %v2094 = vmul.f32 %v2061, %v2093
    %v2095 = vsub.f32 1.0, %v2094
    %v2096 = vmul.f32 %v2093, %v2095
    %v2097 = vadd.f32 %v2093, %v2096
    %vm2098 = vweird.f32 %v2061
    %vm2099 = vweird.f32 %v2093
    %vm2100 = vmor %vm2098, %vm2099
    %v2101 = vsel %vm2100, %v2093, %v2097
    %v2102 = vand.u32 2147483647, %v2061
    %vm2103 = vcmp.eq.f32.partialorder %v2102, 8.507059e+37
    %v2104 = vand.u32 %v2061, 2147483648
    %v2105 = vor.u32 1.1754944e-38, %v2104
    %v2106 = vsel %vm2103, %v2105, %v2101
    %v2107 = vmul.f32 1.0, %v2106
    %v2108 = vrcp.pop %v2062
    %v2109 = vmul.f32 %v2062, %v2108
    %v2110 = vsub.f32 1.0, %v2109
    %v2111 = vmul.f32 %v2108, %v2110
    %v2112 = vadd.f32 %v2108, %v2111
    %vm2113 = vweird.f32 %v2062
    %vm2114 = vweird.f32 %v2108
    %vm2115 = vmor %vm2113, %vm2114
    %v2116 = vsel %vm2115, %v2108, %v2112
    %v2117 = vand.u32 2147483647, %v2062
    %vm2118 = vcmp.eq.f32.partialorder %v2117, 8.507059e+37
    %v2119 = vand.u32 %v2062, 2147483648
    %v2120 = vor.u32 1.1754944e-38, %v2119
    %v2121 = vsel %vm2118, %v2120, %v2116
    %v2122 = vmul.f32 1.0, %v2121
    %v2123 = vmul.f32 %v2077, %v2077
    %v2124 = vmul.f32 %v2092, %v2092
    %v2125 = vmul.f32 %v2107, %v2107
    %v2126 = vmul.f32 %v2122, %v2122
    %v2127 = vadd.f32 %v2123, %v2124
    %v2128 = vadd.f32 %v2127, %v2125
    %v2129 = vadd.f32 %v2128, %v2126
    %2130 = vadd.xlane.f32.xlu0 %v2129
    %v2131 = vpop.xlane.xlu0 %2130
    %v2132 = vrsqrt.pop %v2131
    %v2133 = vmul.f32 %v2132, %v2131
    %v2134 = vmul.f32 %v2133, %v2132
    %v2135 = vmul.f32 0.5, %v2134
    %v2136 = vsub.f32 1.5, %v2135
    %v2137 = vmul.f32 %v2132, %v2136
    %v2138 = vmul.f32 %v2131, %v2137
    %vm2139 = vcmp.eq.f32.partialorder %v2131, inf
    %v2140 = vsel %vm2139, %v2131, %v2138
    %vm2141 = vcmp.eq.f32.partialorder %v2131, 0.0
    %v2142 = vand.u32 %v2131, 2147483648
    %v2143 = vsel %vm2141, %v2142, %v2140
    %v2144 = vmax.f32 %v2143, 1e-12
    %v2145 = vrcp.pop %v2144
    %v2146 = vmul.f32 %v2144, %v2145
    %v2147 = vsub.f32 1.0, %v2146
    %v2148 = vmul.f32 %v2145, %v2147
    %v2149 = vadd.f32 %v2145, %v2148
    %vm2150 = vweird.f32 %v2144
    %vm2151 = vweird.f32 %v2145
    %vm2152 = vmor %vm2150, %vm2151
    %v2153 = vsel %vm2152, %v2145, %v2149
    %v2154 = vand.u32 2147483647, %v2144
    %vm2155 = vcmp.eq.f32.partialorder %v2154, 8.507059e+37
    %v2156 = vand.u32 %v2144, 2147483648
    %v2157 = vor.u32 1.1754944e-38, %v2156
    %v2158 = vsel %vm2155, %v2157, %v2153
    %v2159 = vmul.f32 %v2077, %v2158
    %v2160 = vmul.f32 %v2092, %v2158
    %v2161 = vmul.f32 %v2107, %v2158
    %v2162 = vmul.f32 %v2122, %v2158
    %v2163 = vld [vmem:[#allocation13] sm:$0xff]
    %v2164 = vld [vmem:[#allocation13 + $0x8] sm:$0xff]
    %v2165 = vld [vmem:[#allocation13 + $0x10] sm:$0xff]
    %v2166 = vld [vmem:[#allocation13 + $0x18] sm:$0xff]
    %v2167 = vld [vmem:[#allocation13 + $0x20] sm:$0xff]
    %v2168 = vld [vmem:[#allocation13 + $0x28] sm:$0xff]
    %v2169 = vld [vmem:[#allocation13 + $0x30] sm:$0xff]
    %v2170 = vld [vmem:[#allocation13 + $0x38] sm:$0xff]
    %v2171 = vld [vmem:[#allocation13 + $0x40] sm:$0xff]
    %v2172 = vld [vmem:[#allocation13 + $0x48] sm:$0xff]
    %v2173 = vld [vmem:[#allocation13 + $0x50] sm:$0xff]
    %v2174 = vld [vmem:[#allocation13 + $0x58] sm:$0xff]
    %v2175 = vld [vmem:[#allocation13 + $0x60] sm:$0xff]
    %v2176 = vld [vmem:[#allocation13 + $0x68] sm:$0xff]
    %v2177 = vld [vmem:[#allocation13 + $0x70] sm:$0xff]
    %v2178 = vld [vmem:[#allocation13 + $0x78] sm:$0xff]
    %v2179 = vld [vmem:[#allocation13 + $0x80] sm:$0xff]
    %v2180 = vld [vmem:[#allocation13 + $0x88] sm:$0xff]
    %v2181 = vld [vmem:[#allocation13 + $0x90] sm:$0xff]
    %v2182 = vld [vmem:[#allocation13 + $0x98] sm:$0xff]
    %v2183 = vld [vmem:[#allocation13 + $0xa0] sm:$0xff]
    %v2184 = vld [vmem:[#allocation13 + $0xa8] sm:$0xff]
    %v2185 = vld [vmem:[#allocation13 + $0xb0] sm:$0xff]
    %v2186 = vld [vmem:[#allocation13 + $0xb8] sm:$0xff]
    %v2187 = vld [vmem:[#allocation13 + $0xc0] sm:$0xff]
    %v2188 = vld [vmem:[#allocation13 + $0xc8] sm:$0xff]
    %v2189 = vld [vmem:[#allocation13 + $0xd0] sm:$0xff]
    %v2190 = vld [vmem:[#allocation13 + $0xd8] sm:$0xff]
    %v2191 = vld [vmem:[#allocation13 + $0xe0] sm:$0xff]
    %v2192 = vld [vmem:[#allocation13 + $0xe8] sm:$0xff]
    %v2193 = vld [vmem:[#allocation13 + $0xf0] sm:$0xff]
    %v2194 = vld [vmem:[#allocation13 + $0xf8] sm:$0xff]
    %v2195 = vld [vmem:[#allocation13 + $0x100] sm:$0xff]
    %v2196 = vld [vmem:[#allocation13 + $0x108] sm:$0xff]
    %v2197 = vld [vmem:[#allocation13 + $0x110] sm:$0xff]
    %v2198 = vld [vmem:[#allocation13 + $0x118] sm:$0xff]
    %v2199 = vld [vmem:[#allocation13 + $0x120] sm:$0xff]
    %v2200 = vld [vmem:[#allocation13 + $0x128] sm:$0xff]
    %v2201 = vld [vmem:[#allocation13 + $0x130] sm:$0xff]
    %v2202 = vld [vmem:[#allocation13 + $0x138] sm:$0xff]
    %v2203 = vld [vmem:[#allocation13 + $0x140] sm:$0xff]
    %v2204 = vld [vmem:[#allocation13 + $0x148] sm:$0xff]
    %v2205 = vld [vmem:[#allocation13 + $0x150] sm:$0xff]
    %v2206 = vld [vmem:[#allocation13 + $0x158] sm:$0xff]
    %v2207 = vld [vmem:[#allocation13 + $0x160] sm:$0xff]
    %v2208 = vld [vmem:[#allocation13 + $0x168] sm:$0xff]
    %v2209 = vld [vmem:[#allocation13 + $0x170] sm:$0xff]
    %v2210 = vld [vmem:[#allocation13 + $0x178] sm:$0xff]
    %v2211 = vld [vmem:[#allocation13 + $0x180] sm:$0xff]
    %v2212 = vld [vmem:[#allocation13 + $0x188] sm:$0xff]
    %v2213 = vld [vmem:[#allocation13 + $0x190] sm:$0xff]
    %v2214 = vld [vmem:[#allocation13 + $0x198] sm:$0xff]
    %v2215 = vld [vmem:[#allocation13 + $0x1a0] sm:$0xff]
    %v2216 = vld [vmem:[#allocation13 + $0x1a8] sm:$0xff]
    %v2217 = vld [vmem:[#allocation13 + $0x1b0] sm:$0xff]
    %v2218 = vld [vmem:[#allocation13 + $0x1b8] sm:$0xff]
    %v2219 = vld [vmem:[#allocation13 + $0x1c0] sm:$0xff]
    %v2220 = vld [vmem:[#allocation13 + $0x1c8] sm:$0xff]
    %v2221 = vld [vmem:[#allocation13 + $0x1d0] sm:$0xff]
    %v2222 = vld [vmem:[#allocation13 + $0x1d8] sm:$0xff]
    %v2223 = vld [vmem:[#allocation13 + $0x1e0] sm:$0xff]
    %v2224 = vld [vmem:[#allocation13 + $0x1e8] sm:$0xff]
    %v2225 = vld [vmem:[#allocation13 + $0x1f0] sm:$0xff]
    %v2226 = vld [vmem:[#allocation13 + $0x1f8] sm:$0xff]
    %2227 = vmatpush.msra.mxu0 %v2178
    %2228 = vmatpush.msra.mxu0 %v2177
    %2229 = vmatpush.msra.mxu0 %v2176
    %2230 = vmatpush.msra.mxu0 %v2175
    %2231 = vmatpush.msra.mxu0 %v2174
    %2232 = vmatpush.msra.mxu0 %v2173
    %2233 = vmatpush.msra.mxu0 %v2172
    %2234 = vmatpush.msra.mxu0 %v2171
    %2235 = vmatpush.msra.mxu0 %v2170
    %2236 = vmatpush.msra.mxu0 %v2169
    %2237 = vmatpush.msra.mxu0 %v2168
    %2238 = vmatpush.msra.mxu0 %v2167
    %2239 = vmatpush.msra.mxu0 %v2166
    %2240 = vmatpush.msra.mxu0 %v2165
    %2241 = vmatpush.msra.mxu0 %v2164
    %2242 = vmatpush.msra.mxu0 %v2163
    %2243 = vmatmul.f32.gmra.mxu0 %v2159
    %v2244 = vpop.f32.mrf.mxu0
    %v2245 = vadd.f32 0.0, %v2244
    %2246 = vdwg.mxu0
    %2247 = vmatpush.msra.mxu0 %v2194
    %2248 = vmatpush.msra.mxu0 %v2193
    %2249 = vmatpush.msra.mxu0 %v2192
    %2250 = vmatpush.msra.mxu0 %v2191
    %2251 = vmatpush.msra.mxu0 %v2190
    %2252 = vmatpush.msra.mxu0 %v2189
    %2253 = vmatpush.msra.mxu0 %v2188
    %2254 = vmatpush.msra.mxu0 %v2187
    %2255 = vmatpush.msra.mxu0 %v2186
    %2256 = vmatpush.msra.mxu0 %v2185
    %2257 = vmatpush.msra.mxu0 %v2184
    %2258 = vmatpush.msra.mxu0 %v2183
    %2259 = vmatpush.msra.mxu0 %v2182
    %2260 = vmatpush.msra.mxu0 %v2181
    %2261 = vmatpush.msra.mxu0 %v2180
    %2262 = vmatpush.msra.mxu0 %v2179
    %2263 = vmatmul.f32.gmra.mxu0 %v2160
    %v2264 = vpop.f32.mrf.mxu0
    %v2265 = vadd.f32 %v2245, %v2264
    %2266 = vdwg.mxu0
    %2267 = vmatpush.msra.mxu0 %v2210
    %2268 = vmatpush.msra.mxu0 %v2209
    %2269 = vmatpush.msra.mxu0 %v2208
    %2270 = vmatpush.msra.mxu0 %v2207
    %2271 = vmatpush.msra.mxu0 %v2206
    %2272 = vmatpush.msra.mxu0 %v2205
    %2273 = vmatpush.msra.mxu0 %v2204
    %2274 = vmatpush.msra.mxu0 %v2203
    %2275 = vmatpush.msra.mxu0 %v2202
    %2276 = vmatpush.msra.mxu0 %v2201
    %2277 = vmatpush.msra.mxu0 %v2200
    %2278 = vmatpush.msra.mxu0 %v2199
    %2279 = vmatpush.msra.mxu0 %v2198
    %2280 = vmatpush.msra.mxu0 %v2197
    %2281 = vmatpush.msra.mxu0 %v2196
    %2282 = vmatpush.msra.mxu0 %v2195
    %2283 = vmatmul.f32.gmra.mxu0 %v2161
    %v2284 = vpop.f32.mrf.mxu0
    %v2285 = vadd.f32 %v2265, %v2284
    %2286 = vdwg.mxu0
    %2287 = vmatpush.msra.mxu0 %v2226
    %2288 = vmatpush.msra.mxu0 %v2225
    %2289 = vmatpush.msra.mxu0 %v2224
    %2290 = vmatpush.msra.mxu0 %v2223
    %2291 = vmatpush.msra.mxu0 %v2222
    %2292 = vmatpush.msra.mxu0 %v2221
    %2293 = vmatpush.msra.mxu0 %v2220
    %2294 = vmatpush.msra.mxu0 %v2219
    %2295 = vmatpush.msra.mxu0 %v2218
    %2296 = vmatpush.msra.mxu0 %v2217
    %2297 = vmatpush.msra.mxu0 %v2216
    %2298 = vmatpush.msra.mxu0 %v2215
    %2299 = vmatpush.msra.mxu0 %v2214
    %2300 = vmatpush.msra.mxu0 %v2213
    %2301 = vmatpush.msra.mxu0 %v2212
    %2302 = vmatpush.msra.mxu0 %v2211
    %2303 = vmatmul.f32.gmra.mxu0 %v2162
    %v2304 = vpop.f32.mrf.mxu0
    %v2305 = vadd.f32 %v2285, %v2304
    %2306 = vdwg.mxu0
    %2307 = vst [vmem:[#allocation14] sm:$0xff] %v2305
    // Predicated region
    $region62: #{tpu_custom_call.1} parent=1 // pred_check
      _
    $region63: #{tpu_custom_call.1} parent=1 // pred_check_branch
      %2309 = sbr.rel (0) target = $region65
    $region64: #{tpu_custom_call.1} parent=1 // pred_region
      %2311 = vsyncadd [#allocation4], 0
      %s2313 = sshll.u32 [#allocation14], 4
      %s2314 = int_to_ptr.vmem [resolvable:$true] %s2313
      %s2315 = sshll.u32 %s8, 4
      %s2316 = int_to_ptr.hbm [resolvable:$true] %s2315
      %2318 = dma.vmem_to_hbm [thread:$0]  %s2314, 128, %s2316, [#allocation4]
    $region65: #{tpu_custom_call.1} parent=1 // pred_fallthru
      _
    // Predicated region
    $region66: #{tpu_custom_call.1} parent=1 // pred_check
      _
    $region67: #{tpu_custom_call.1} parent=1 // pred_check_branch
      %2320 = sbr.rel (0) target = $region69
    $region68: #{tpu_custom_call.1} parent=1 // pred_region
      %2322 = dma.done [#allocation4], 128
    $region69: #{tpu_custom_call.1} parent=1 // pred_fallthru
      _
    %2323 = vsyncpa [#allocation3], 1
    %2324 = vsyncpa [#allocation6], 1
    %2325 = vsyncpa [#allocation9], 1
    %2326 = vsyncpa [#allocation12], 1
    %2327 = vsyncpa [#allocation4], 1

</llo_original>
